<compile_context>
chip_gen: v7x
topology: tpu7x:2x2x1
jax: 0.10.0
libtpu: 0.0.40
codegen_flags: <defaults>
</compile_context>

<pallas_src>
import math

import numpy as np
import jax
import jax.numpy as jnp
from jax.experimental import pallas as pl
from jax.experimental.pallas import tpu as pltpu


# ----------------------------------------------------------------------------
# Real-basis Wigner 3j coefficients (e3nn conventions; l=1 basis order
# (y, z, x), l=2 basis order (xy, yz, 2z^2-x^2-y^2, zx, x^2-y^2)).
# ----------------------------------------------------------------------------
def wigner_3j(l1, l2, l3):
    if (l1, l2, l3) == (0, 0, 0):
        return np.ones((1, 1, 1))
    if (l1, l2, l3) == (0, 1, 1):
        c = np.zeros((1, 3, 3)); c[0] = np.eye(3) / math.sqrt(3); return c
    if (l1, l2, l3) == (1, 0, 1):
        c = np.zeros((3, 1, 3)); c[:, 0, :] = np.eye(3) / math.sqrt(3); return c
    if (l1, l2, l3) == (1, 1, 0):
        c = np.zeros((3, 3, 1)); c[:, :, 0] = np.eye(3) / math.sqrt(3); return c
    if (l1, l2, l3) == (1, 1, 1):
        c = np.zeros((3, 3, 3))
        for i, j, k in [(0, 1, 2), (1, 2, 0), (2, 0, 1)]:
            c[i, j, k] = 1.0 / math.sqrt(6)
            c[j, i, k] = -1.0 / math.sqrt(6)
        return c
    if (l1, l2, l3) == (1, 1, 2):
        c = np.zeros((3, 3, 5))
        a = 1.0 / math.sqrt(10)
        b = 1.0 / math.sqrt(30)
        c[0, 2, 0] = c[2, 0, 0] = a            # xy
        c[0, 1, 1] = c[1, 0, 1] = a            # yz
        c[0, 0, 2] = -b; c[1, 1, 2] = 2 * b; c[2, 2, 2] = -b   # 2z^2-x^2-y^2
        c[1, 2, 3] = c[2, 1, 3] = a            # zx
        c[0, 0, 4] = -a; c[2, 2, 4] = a        # x^2-y^2
        return c
    raise NotImplementedError((l1, l2, l3))


# ----------------------------------------------------------------------------
# Module "__init__" equivalent: irreps, paths, CG coefficients (glue in numpy).
# irreps are tuples (mul, l, parity).
# ----------------------------------------------------------------------------
IRREPS_IN1 = [(2, 0, +1), (2, 1, -1)]   # 2x0e + 2x1o  (already regrouped)
IRREPS_IN2 = [(1, 0, +1), (1, 1, -1)]   # 1x0e + 1x1o


def _slices(irreps):
    starts, off = [], 0
    for (mul, l, _p) in irreps:
        starts.append(off)
        off += mul * (2 * l + 1)
    return starts, off


S1, D1 = _slices(IRREPS_IN1)   # D1 = 8
S2, D2 = _slices(IRREPS_IN2)   # D2 = 4

PATHS = []
for (mul1, l1, p1), st1 in zip(IRREPS_IN1, S1):
    for (mul2, l2, p2), st2 in zip(IRREPS_IN2, S2):
        for l3 in range(abs(l1 - l2), l1 + l2 + 1):   # filter_ir_out = None
            PATHS.append(dict(l1=l1, l2=l2, l3=l3, p3=p1 * p2,
                              mul1=mul1, mul2=mul2, st1=st1, st2=st2,
                              size=mul1 * mul2 * (2 * l3 + 1)))


def _irrep_key(l, p):  # e3nn Irrep ordering: 0e,0o,1o,1e,2e,2o,...
    return (l, -p if l % 2 == 0 else p)


# self.inv: indices of the path-chunks in sorted-output-irreps order
INV = [i for i, _ in sorted(enumerate(PATHS),
                            key=lambda t: _irrep_key(t[1]["l3"], t[1]["p3"]) + (t[0],))]
D_OUT = sum(p["size"] for p in PATHS)   # 32

# Dense bilinear matrix W: out[b, c] = sum_{i,j} in1[b, i] * in2[b, j] * W[i*D2+j, c]
W_np = np.zeros((D1 * D2, D_OUT), dtype=np.float32)
_off = 0
for _pidx in INV:
    _p = PATHS[_pidx]
    _d1, _d2, _d3 = 2 * _p["l1"] + 1, 2 * _p["l2"] + 1, 2 * _p["l3"] + 1
    _cg = wigner_3j(_p["l1"], _p["l2"], _p["l3"]) * math.sqrt(_d3)
    for v in range(_p["mul2"]):
        for u in range(_p["mul1"]):
            for i in range(_d1):
                for j in range(_d2):
                    for k in range(_d3):
                        row = (_p["st1"] + u * _d1 + i) * D2 + (_p["st2"] + v * _d2 + j)
                        col = _off + (v * _p["mul1"] + u) * _d3 + k
                        W_np[row, col] += _cg[i, j, k]
    _off += _p["size"]

# ----------------------------------------------------------------------------
# Lane-dense batch packing: G batch rows per packed row.
#   packed x1:  (B/G, G*D1)   packed x2: (B/G, G*D2)   packed out: (B/G, G*D_OUT)
# Block-diagonal CG matrix + constant 0/1 expansion matrices so the kernel is
# three MXU matmuls and one elementwise multiply.
# ----------------------------------------------------------------------------
G = 8                       # 256-wide K / output (native MXU tile on v6e/v7x)
KDIM = G * D1 * D2          # 256
NOUT = G * D_OUT            # 256

W_blk_np = np.zeros((KDIM, NOUT), dtype=np.float32)
R_blk_np = np.zeros((G * D1, KDIM), dtype=np.float32)   # (64, 256)
T_blk_np = np.zeros((G * D2, KDIM), dtype=np.float32)   # (32, 256)
for _g in range(G):
    W_blk_np[_g * D1 * D2:(_g + 1) * D1 * D2, _g * D_OUT:(_g + 1) * D_OUT] = W_np
    for _i in range(D1):
        for _j in range(D2):
            _q = _g * D1 * D2 + _i * D2 + _j
            R_blk_np[_g * D1 + _i, _q] = 1.0
            T_blk_np[_g * D2 + _j, _q] = 1.0


# ----------------------------------------------------------------------------
# Pallas kernel.
#   K[b, g*D1*D2 + i*D2 + j] = x1[b*G+g, i] * x2[b*G+g, j]   (via MXU expansion)
#   out = K @ W_blk                                          (block-diag CG)
# ----------------------------------------------------------------------------
TB_ROWS = 256   # packed rows per grid step (= 2048 batch elements)


def ftp_kernel(x1_ref, x2_ref, r_ref, t_ref, w_ref, o_ref):
    x1e = jnp.dot(x1_ref[...], r_ref[...], preferred_element_type=jnp.float32)
    x2e = jnp.dot(x2_ref[...], t_ref[...], preferred_element_type=jnp.float32)
    k = x1e * x2e
    o_ref[...] = jnp.dot(k, w_ref[...], preferred_element_type=jnp.float32)


def full_tensor_product_sparse(x1, x2, r_blk, t_blk, w_blk):
    B = x1.shape[0]
    rows = -(-B // G)
    if rows > TB_ROWS:
        rows_pad = -(-rows // TB_ROWS) * TB_ROWS
        tb = TB_ROWS
    else:
        rows_pad = -(-rows // 8) * 8
        tb = rows_pad
    b_pad = rows_pad * G

    x1p = jnp.pad(x1, ((0, b_pad - B), (0, 0))).reshape(rows_pad, G * D1)
    x2p = jnp.pad(x2, ((0, b_pad - B), (0, 0))).reshape(rows_pad, G * D2)

    out_p = pl.pallas_call(
        ftp_kernel,
        out_shape=jax.ShapeDtypeStruct((rows_pad, NOUT), jnp.float32),
        grid=(rows_pad // tb,),
        in_specs=[
            pl.BlockSpec((tb, G * D1), lambda i: (i, 0)),
            pl.BlockSpec((tb, G * D2), lambda i: (i, 0)),
            pl.BlockSpec((G * D1, KDIM), lambda i: (0, 0)),   # constant block index:
            pl.BlockSpec((G * D2, KDIM), lambda i: (0, 0)),   # fetched once, reused
            pl.BlockSpec((KDIM, NOUT), lambda i: (0, 0)),
        ],
        out_specs=pl.BlockSpec((tb, NOUT), lambda i: (i, 0)),
        compiler_params=pltpu.CompilerParams(
            dimension_semantics=("parallel",)),
    )(x1p, x2p, r_blk, t_blk, w_blk)

    return out_p.reshape(b_pad, D_OUT)[:B]


# ----------------------------------------------------------------------------
# Pure-JAX reference mirroring the torch forward (per-path sparse CG sums are
# mathematically identical to the dense per-path contraction).
# ----------------------------------------------------------------------------
def reference(x1, x2):
    B = x1.shape[0]
    chunks = []
    for p in PATHS:
        d1, d2, d3 = 2 * p["l1"] + 1, 2 * p["l2"] + 1, 2 * p["l3"] + 1
        a = x1[:, p["st1"]:p["st1"] + p["mul1"] * d1].reshape(B, p["mul1"], d1)
        b = x2[:, p["st2"]:p["st2"] + p["mul2"] * d2].reshape(B, p["mul2"], d2)
        cg = jnp.asarray(wigner_3j(p["l1"], p["l2"], p["l3"]) * math.sqrt(d3),
                         dtype=jnp.float32)
        # chunk[m3, u, v, b] -> transpose -> (b, v, u, m3) -> reshape
        c = jnp.einsum("bui,bvj,ijk->bvuk", a, b, cg).reshape(B, -1)
        chunks.append(c)
    return jnp.concatenate([chunks[i] for i in INV], axis=-1)


if __name__ == "__main__":
    key = jax.random.PRNGKey(0)
    k1, k2 = jax.random.split(key)
    B = 2500   # deliberately not a multiple of G*TB_ROWS: exercises padding + grid>1
    input1 = jax.random.normal(k1, (B, D1), dtype=jnp.float32)
    input2 = jax.random.normal(k2, (B, D2), dtype=jnp.float32)

    r_blk = jnp.asarray(R_blk_np)
    t_blk = jnp.asarray(T_blk_np)
    w_blk = jnp.asarray(W_blk_np)

    out = full_tensor_product_sparse(input1, input2, r_blk, t_blk, w_blk)
    out = jax.block_until_ready(out)

    ref = reference(input1, input2)
    assert out.shape == (B, D_OUT) and out.dtype == jnp.float32
    np.testing.assert_allclose(np.asarray(out), np.asarray(ref), rtol=1e-5, atol=1e-5)
    print("KERNEL_OK")
</pallas_src>

<mosaic_0001>
module attributes {stable_mosaic.version = 11 : i64} {
  func.func @ftp_kernel(%arg0: i32, %arg1: memref<256x64xf32, #tpu.memory_space<vmem>>, %arg2: memref<256x32xf32, #tpu.memory_space<vmem>>, %arg3: memref<64x256xf32, #tpu.memory_space<vmem>>, %arg4: memref<32x256xf32, #tpu.memory_space<vmem>>, %arg5: memref<256x256xf32, #tpu.memory_space<vmem>>, %arg6: memref<256x256xf32, #tpu.memory_space<vmem>>) attributes {dimension_semantics = [#tpu.dimension_semantics<parallel>], iteration_bounds = array<i64: 2>, scalar_prefetch = 0 : i64, scratch_operands = 0 : i64, tpu.core_type = #tpu.core_type<tc>, window_params = [{transform_indices = @transform_0, window_bounds = array<i64: 256, 64>}, {transform_indices = @transform_1, window_bounds = array<i64: 256, 32>}, {pipeline_mode = #tpu.pipeline_mode<synchronous>, transform_indices = @transform_2, window_bounds = array<i64: 64, 256>}, {pipeline_mode = #tpu.pipeline_mode<synchronous>, transform_indices = @transform_3, window_bounds = array<i64: 32, 256>}, {pipeline_mode = #tpu.pipeline_mode<synchronous>, transform_indices = @transform_4, window_bounds = array<i64: 256, 256>}, {transform_indices = @transform_5, window_bounds = array<i64: 256, 256>}]} {
    %c0 = arith.constant 0 : index
    %c0_0 = arith.constant 0 : index
    %0 = vector.load %arg1[%c0, %c0_0] : memref<256x64xf32, #tpu.memory_space<vmem>>, vector<256x64xf32>
    %c0_1 = arith.constant 0 : index
    %c0_2 = arith.constant 0 : index
    %1 = vector.load %arg3[%c0_1, %c0_2] : memref<64x256xf32, #tpu.memory_space<vmem>>, vector<64x256xf32>
    %cst = arith.constant dense<0.000000e+00> : vector<256x256xf32>
    %2 = tpu.matmul %0, %1, %cst {dimension_numbers = #tpu.dot_dimension_numbers<[1], [0], [0], [1], [0, 0, 1, 1], [], []>} : vector<256x64xf32>, vector<64x256xf32>, vector<256x256xf32> -> vector<256x256xf32>
    %c0_3 = arith.constant 0 : index
    %c0_4 = arith.constant 0 : index
    %3 = vector.load %arg2[%c0_3, %c0_4] : memref<256x32xf32, #tpu.memory_space<vmem>>, vector<256x32xf32>
    %c0_5 = arith.constant 0 : index
    %c0_6 = arith.constant 0 : index
    %4 = vector.load %arg4[%c0_5, %c0_6] : memref<32x256xf32, #tpu.memory_space<vmem>>, vector<32x256xf32>
    %cst_7 = arith.constant dense<0.000000e+00> : vector<256x256xf32>
    %5 = tpu.matmul %3, %4, %cst_7 {dimension_numbers = #tpu.dot_dimension_numbers<[1], [0], [0], [1], [0, 0, 1, 1], [], []>} : vector<256x32xf32>, vector<32x256xf32>, vector<256x256xf32> -> vector<256x256xf32>
    %6 = arith.mulf %2, %5 : vector<256x256xf32>
    %c0_8 = arith.constant 0 : index
    %c0_9 = arith.constant 0 : index
    %7 = vector.load %arg5[%c0_8, %c0_9] : memref<256x256xf32, #tpu.memory_space<vmem>>, vector<256x256xf32>
    %cst_10 = arith.constant dense<0.000000e+00> : vector<256x256xf32>
    %8 = tpu.matmul %6, %7, %cst_10 {dimension_numbers = #tpu.dot_dimension_numbers<[1], [0], [0], [1], [0, 0, 1, 1], [], []>} : vector<256x256xf32>, vector<256x256xf32>, vector<256x256xf32> -> vector<256x256xf32>
    %c0_11 = arith.constant 0 : index
    %c0_12 = arith.constant 0 : index
    %9 = vector.load %arg6[%c0_11, %c0_12] : memref<256x256xf32, #tpu.memory_space<vmem>>, vector<256x256xf32>
    tpu.vector_store %arg6[%c0_11, %c0_12], %8 {strides = array<i32>} : memref<256x256xf32, #tpu.memory_space<vmem>>, vector<256x256xf32>,
    return
  }
  func.func @transform_0(%arg0: i32) -> (i32, i32) {
    %c0_i32 = arith.constant 0 : i32
    %c0_i32_0 = arith.constant 0 : i32
    return %arg0, %c0_i32 : i32, i32
  }
  func.func @transform_1(%arg0: i32) -> (i32, i32) {
    %c0_i32 = arith.constant 0 : i32
    %c0_i32_0 = arith.constant 0 : i32
    return %arg0, %c0_i32 : i32, i32
  }
  func.func @transform_2(%arg0: i32) -> (i32, i32) {
    %c0_i32 = arith.constant 0 : i32
    %c0_i32_0 = arith.constant 0 : i32
    %c0_i32_1 = arith.constant 0 : i32
    return %c0_i32, %c0_i32_0 : i32, i32
  }
  func.func @transform_3(%arg0: i32) -> (i32, i32) {
    %c0_i32 = arith.constant 0 : i32
    %c0_i32_0 = arith.constant 0 : i32
    %c0_i32_1 = arith.constant 0 : i32
    return %c0_i32, %c0_i32_0 : i32, i32
  }
  func.func @transform_4(%arg0: i32) -> (i32, i32) {
    %c0_i32 = arith.constant 0 : i32
    %c0_i32_0 = arith.constant 0 : i32
    %c0_i32_1 = arith.constant 0 : i32
    return %c0_i32, %c0_i32_0 : i32, i32
  }
  func.func @transform_5(%arg0: i32) -> (i32, i32) {
    %c0_i32 = arith.constant 0 : i32
    %c0_i32_0 = arith.constant 0 : i32
    return %arg0, %c0_i32 : i32, i32
  }
}

</mosaic_0001>

<llo_original>
// kernel: tpu_custom_call.1
$region0: #{tpu_custom_call.1}
  #allocation0 [shape = 'u32[]', space=smem, size = 0x4, offset = 0x4, fixed_abs, tag = 'smem constant byte address 0x4 - core index']
  #allocation1 [shape = 'u32[144,128]{1,0:T(1,128)}', space=vmem, size = 0x12000, scoped, tag = 'internal scratch']
  %s0 = inlined_call_operand.vmem [shape: f32[512,64], index: 0, kind: input, shape index: {}]
  %s1 = inlined_call_operand.vmem [shape: f32[512,32], index: 1, kind: input, shape index: {}]
  %s2 = inlined_call_operand.vmem [shape: f32[64,256], index: 2, kind: input, shape index: {}]
  %s3 = inlined_call_operand.vmem [shape: f32[32,256], index: 3, kind: input, shape index: {}]
  %s4 = inlined_call_operand.vmem [shape: f32[256,256], index: 4, kind: input, shape index: {}]
  %s5 = inlined_call_operand.hbm [shape: f32[512,256], index: 5, kind: output, shape index: {}]
  %s6 = sld [smem:[#allocation0]]
  $region53: #{tpu_custom_call.1} parent=0
    _
  %s8 = ssub.s32 1, %s6
  %s9 = scalar_select 0, %s8, %s6
  $region1: #{tpu_custom_call.1} parent=0
    #allocation2 [shape = 'u8[524288]{0}', space=vmem, size = 0x80000, scoped, tag = 'output window, operand 0']
    #allocation3 [shape = 's32[2]{0}', space=sflag, size = 0x8, scoped, tag = 'scoped memory for tpu_custom_call.1']
    %10 = vsyncpa [#allocation3], 0
    %s11 = scalar_lea.sflag [#allocation3], 1
    %12 = vsyncpa %s11, 0
    loop: start=0, step=1, limit=4
    $region2: #{tpu_custom_call.1} parent=1 // loop_pre_header
      _
    $region3: #{tpu_custom_call.1} parent=1 // loop_header
      %s14 = sphi 0, %s18
      %p15 = scmp.ge.s32.totalorder %s14, 4
      %s24 = sphi 0, %s26
      %s27 = sphi 0, %s24
      %s28 = sphi 0, %s27
      %s44 = sphi 0, %s28
      %s50 = sphi 0, %s52
      %s53 = sphi 0, %s50
      %s54 = sphi 0, %s53
      %s70 = sphi 0, %s54
      %s74 = sphi 0, %s74
      %s76 = sphi 0, %s74
      %s77 = sphi 0, %s76
      %s91 = sphi 0, %s77
      %s95 = sphi 0, %s95
      %s97 = sphi 0, %s95
      %s98 = sphi 0, %s97
      %s112 = sphi 0, %s98
      %s116 = sphi 0, %s116
      %s118 = sphi 0, %s116
      %s119 = sphi 0, %s118
      %s133 = sphi 0, %s119
      %s139 = sphi 0, %s141
      %s142 = sphi 0, %s139
      %s143 = sphi 0, %s142
      %s159 = sphi 0, %s143
    $region4: #{tpu_custom_call.1} parent=1 // loop_header_branch
      %17 = sbr.rel (%p15) target = $region8
    $region5: #{tpu_custom_call.1} parent=1 // loop_body
      %s19 = ssub.s32 %s14, 1
      %s20 = ssub.s32 %s14, 2
      %s21 = sadd.s32 %s14, 1
      %s22 = ssub.s32 %s14, %s21
      %p23 = scmp.eq.s32.totalorder %s22, 0
      %s25 = sadd.s32 %s24, 1
      %s26 = scalar_select %p23, %s24, %s25
      %p29 = pneg %p23
      %p30 = scmp.eq.s32.totalorder %s14, 1
      %p31 = por %p29, %p30
      %p32 = scmp.ne.s32.totalorder %s24, %s27
      %p33 = scmp.eq.s32.totalorder %s14, 0
      %p34 = por %p32, %p33
      %p35 = scmp.ne.s32.totalorder %s24, %s27
      %p36 = scmp.eq.s32.totalorder %s19, 1
      %p37 = por %p35, %p36
      %p38 = scmp.ne.s32.totalorder %s27, %s28
      %p39 = scmp.eq.s32.totalorder %s19, 0
      %p40 = por %p38, %p39
      %p41 = scmp.ne.s32.totalorder %s27, %s28
      %p42 = scmp.eq.s32.totalorder %s20, 1
      %p43 = por %p41, %p42
      %p45 = scmp.ne.s32.totalorder %s28, %s44
      %p46 = scmp.eq.s32.totalorder %s20, 0
      %p47 = por %p45, %p46
      %s48 = ssub.s32 %s14, %s21
      %p49 = scmp.eq.s32.totalorder %s48, 0
      %s51 = sadd.s32 %s50, 1
      %s52 = scalar_select %p49, %s50, %s51
      %p55 = pneg %p49
      %p56 = scmp.eq.s32.totalorder %s14, 1
      %p57 = por %p55, %p56
      %p58 = scmp.ne.s32.totalorder %s50, %s53
      %p59 = scmp.eq.s32.totalorder %s14, 0
      %p60 = por %p58, %p59
      %p61 = scmp.ne.s32.totalorder %s50, %s53
      %p62 = scmp.eq.s32.totalorder %s19, 1
      %p63 = por %p61, %p62
      %p64 = scmp.ne.s32.totalorder %s53, %s54
      %p65 = scmp.eq.s32.totalorder %s19, 0
      %p66 = por %p64, %p65
      %p67 = scmp.ne.s32.totalorder %s53, %s54
      %p68 = scmp.eq.s32.totalorder %s20, 1
      %p69 = por %p67, %p68
      %p71 = scmp.ne.s32.totalorder %s54, %s70
      %p72 = scmp.eq.s32.totalorder %s20, 0
      %p73 = por %p71, %p72
      %s75 = sadd.s32 %s74, 1
      %p78 = scmp.eq.s32.totalorder %s14, 1
      %p79 = scmp.ne.s32.totalorder %s74, %s76
      %p80 = scmp.eq.s32.totalorder %s14, 0
      %p81 = por %p79, %p80
      %p82 = scmp.ne.s32.totalorder %s74, %s76
      %p83 = scmp.eq.s32.totalorder %s19, 1
      %p84 = por %p82, %p83
      %p85 = scmp.ne.s32.totalorder %s76, %s77
      %p86 = scmp.eq.s32.totalorder %s19, 0
      %p87 = por %p85, %p86
      %p88 = scmp.ne.s32.totalorder %s76, %s77
      %p89 = scmp.eq.s32.totalorder %s20, 1
      %p90 = por %p88, %p89
      %p92 = scmp.ne.s32.totalorder %s77, %s91
      %p93 = scmp.eq.s32.totalorder %s20, 0
      %p94 = por %p92, %p93
      %s96 = sadd.s32 %s95, 1
      %p99 = scmp.eq.s32.totalorder %s14, 1
      %p100 = scmp.ne.s32.totalorder %s95, %s97
      %p101 = scmp.eq.s32.totalorder %s14, 0
      %p102 = por %p100, %p101
      %p103 = scmp.ne.s32.totalorder %s95, %s97
      %p104 = scmp.eq.s32.totalorder %s19, 1
      %p105 = por %p103, %p104
      %p106 = scmp.ne.s32.totalorder %s97, %s98
      %p107 = scmp.eq.s32.totalorder %s19, 0
      %p108 = por %p106, %p107
      %p109 = scmp.ne.s32.totalorder %s97, %s98
      %p110 = scmp.eq.s32.totalorder %s20, 1
      %p111 = por %p109, %p110
      %p113 = scmp.ne.s32.totalorder %s98, %s112
      %p114 = scmp.eq.s32.totalorder %s20, 0
      %p115 = por %p113, %p114
      %s117 = sadd.s32 %s116, 1
      %p120 = scmp.eq.s32.totalorder %s14, 1
      %p121 = scmp.ne.s32.totalorder %s116, %s118
      %p122 = scmp.eq.s32.totalorder %s14, 0
      %p123 = por %p121, %p122
      %p124 = scmp.ne.s32.totalorder %s116, %s118
      %p125 = scmp.eq.s32.totalorder %s19, 1
      %p126 = por %p124, %p125
      %p127 = scmp.ne.s32.totalorder %s118, %s119
      %p128 = scmp.eq.s32.totalorder %s19, 0
      %p129 = por %p127, %p128
      %p130 = scmp.ne.s32.totalorder %s118, %s119
      %p131 = scmp.eq.s32.totalorder %s20, 1
      %p132 = por %p130, %p131
      %p134 = scmp.ne.s32.totalorder %s119, %s133
      %p135 = scmp.eq.s32.totalorder %s20, 0
      %p136 = por %p134, %p135
      %s137 = ssub.s32 %s14, %s21
      %p138 = scmp.eq.s32.totalorder %s137, 0
      %s140 = sadd.s32 %s139, 1
      %s141 = scalar_select %p138, %s139, %s140
      %p144 = pneg %p138
      %p145 = scmp.eq.s32.totalorder %s14, 1
      %p146 = por %p144, %p145
      %p147 = scmp.ne.s32.totalorder %s139, %s142
      %p148 = scmp.eq.s32.totalorder %s14, 0
      %p149 = por %p147, %p148
      %p150 = scmp.ne.s32.totalorder %s139, %s142
      %p151 = scmp.eq.s32.totalorder %s19, 1
      %p152 = por %p150, %p151
      %p153 = scmp.ne.s32.totalorder %s142, %s143
      %p154 = scmp.eq.s32.totalorder %s19, 0
      %p155 = por %p153, %p154
      %p156 = scmp.ne.s32.totalorder %s142, %s143
      %p157 = scmp.eq.s32.totalorder %s20, 1
      %p158 = por %p156, %p157
      %p160 = scmp.ne.s32.totalorder %s143, %s159
      %p161 = scmp.eq.s32.totalorder %s20, 0
      %p162 = por %p160, %p161
      %p163 = scmp.le.s32.totalorder 1, %s14
      %p164 = scmp.lt.s32.totalorder %s14, 3
      %p165 = pnand %p163, %p164
      %p166 = pneg %p165
      // Predicated region
      $region9: #{tpu_custom_call.1} parent=5 // pred_check
        _
      $region10: #{tpu_custom_call.1} parent=5 // pred_check_branch
        %168 = sbr.rel (%p165) target = $region12
      $region11: #{tpu_custom_call.1} parent=5 // pred_region
        %s169 = ssub.s32 %s14, 1
        // Predicated region
        $region13: #{tpu_custom_call.1} parent=11 // pred_check
          %p170 = pneg %p87
        $region14: #{tpu_custom_call.1} parent=11 // pred_check_branch
          %172 = sbr.rel (%p170) target = $region16
        $region15: #{tpu_custom_call.1} parent=11 // pred_region
          _
        $region16: #{tpu_custom_call.1} parent=11 // pred_fallthru
          _
        // Predicated region
        $region17: #{tpu_custom_call.1} parent=11 // pred_check
          %p173 = pneg %p108
        $region18: #{tpu_custom_call.1} parent=11 // pred_check_branch
          %175 = sbr.rel (%p173) target = $region20
        $region19: #{tpu_custom_call.1} parent=11 // pred_region
          _
        $region20: #{tpu_custom_call.1} parent=11 // pred_fallthru
          _
        // Predicated region
        $region21: #{tpu_custom_call.1} parent=11 // pred_check
          %p176 = pneg %p129
        $region22: #{tpu_custom_call.1} parent=11 // pred_check_branch
          %178 = sbr.rel (%p176) target = $region24
        $region23: #{tpu_custom_call.1} parent=11 // pred_region
          _
        $region24: #{tpu_custom_call.1} parent=11 // pred_fallthru
          _
      $region12: #{tpu_custom_call.1} parent=5 // pred_fallthru
        _
      %p179 = scmp.lt.s32.totalorder %s14, 2
      // Predicated region
      $region25: #{tpu_custom_call.1} parent=5 // pred_check
        %p180 = pneg %p179
      $region26: #{tpu_custom_call.1} parent=5 // pred_check_branch
        %182 = sbr.rel (%p180) target = $region28
      $region27: #{tpu_custom_call.1} parent=5 // pred_region
        // Predicated region
        $region29: #{tpu_custom_call.1} parent=27 // pred_check
          %p183 = pneg %p34
        $region30: #{tpu_custom_call.1} parent=27 // pred_check_branch
          %185 = sbr.rel (%p183) target = $region32
        $region31: #{tpu_custom_call.1} parent=27 // pred_region
          %s186 = smul.u32 32, %s14
          %p187 = scmp.lt.s32.totalorder %s186, 63
          %s188 = scalar_select %p187, %s186, 63
          %s189 = smul.addr %s188, 8
          %s190 = scalar_lea.vmem %s0, %s189
          %s191 = smul.u32 32, %s14
        $region32: #{tpu_custom_call.1} parent=27 // pred_fallthru
          _
        // Predicated region
        $region33: #{tpu_custom_call.1} parent=27 // pred_check
          %p192 = pneg %p60
        $region34: #{tpu_custom_call.1} parent=27 // pred_check_branch
          %194 = sbr.rel (%p192) target = $region36
        $region35: #{tpu_custom_call.1} parent=27 // pred_region
          %s195 = smul.u32 32, %s14
          %p196 = scmp.lt.s32.totalorder %s195, 63
          %s197 = scalar_select %p196, %s195, 63
          %s198 = smul.addr %s197, 8
          %s199 = scalar_lea.vmem %s1, %s198
          %s200 = smul.u32 32, %s14
        $region36: #{tpu_custom_call.1} parent=27 // pred_fallthru
          _
      $region28: #{tpu_custom_call.1} parent=5 // pred_fallthru
        _
      %p201 = scmp.le.s32.totalorder 1, %s14
      %p202 = scmp.lt.s32.totalorder %s14, 3
      %p203 = pnand %p201, %p202
      %p204 = pneg %p203
      // Predicated region
      $region37: #{tpu_custom_call.1} parent=5 // pred_check
        _
      $region38: #{tpu_custom_call.1} parent=5 // pred_check_branch
        %206 = sbr.rel (%p203) target = $region40
      $region39: #{tpu_custom_call.1} parent=5 // pred_region
        %s207 = ssub.s32 %s14, 1
        %s208 = smul.u32 32, %s19
        %p209 = scmp.lt.s32.totalorder %s208, 63
        %s210 = scalar_select %p209, %s208, 63
        %s211 = smul.addr %s210, 8
        %s212 = scalar_lea.vmem %s0, %s211
        %p213 = pneg %p40
        %p214 = pneg %p37
        %s215 = smul.u32 32, %s19
        %p216 = scmp.lt.s32.totalorder %s215, 63
        %s217 = scalar_select %p216, %s215, 63
        %s218 = smul.addr %s217, 8
        %s219 = scalar_lea.vmem %s1, %s218
        %p220 = pneg %p66
        %p221 = pneg %p63
        %p222 = pneg %p87
        %p223 = pneg %p84
        %p224 = pneg %p108
        %p225 = pneg %p105
        %p226 = pneg %p129
        %p227 = pneg %p126
        %p228 = pneg %p155
        %p229 = pneg %p152
        %s230 = sand.u32 %s142, 1
        %s231 = scalar_lea.sflag [#allocation3], %s230
        %s232 = sand.u32 %s142, 1
        %s233 = smul.addr %s232, 512
        %s234 = scalar_lea.vmem [#allocation2], %s233
        %s235 = smul.u32 32, %s19
        %p236 = scmp.lt.s32.totalorder %s235, 63
        %s237 = scalar_select %p236, %s235, 63
        %s238 = smul.addr %s237, 8
        %s239 = scalar_lea.vmem %s0, %s238
        %s240 = smul.u32 32, %s19
        %s241 = smul.u32 32, %s19
        %p242 = scmp.lt.s32.totalorder %s241, 63
        %s243 = scalar_select %p242, %s241, 63
        %s244 = smul.addr %s243, 8
        %s245 = scalar_lea.vmem %s1, %s244
        %s246 = smul.u32 32, %s19
        %s247 = smul.u32 32, %s19
        %v248 = vld [vmem:[%s239] sm:$0xff]
        %v249 = vld [vmem:[%s239 + $0x8] sm:$0xff]
        %v250 = vld [vmem:[%s239 + $0x10] sm:$0xff]
        %v251 = vld [vmem:[%s239 + $0x18] sm:$0xff]
        %v252 = vld [vmem:[%s239 + $0x20] sm:$0xff]
        %v253 = vld [vmem:[%s239 + $0x28] sm:$0xff]
        %v254 = vld [vmem:[%s239 + $0x30] sm:$0xff]
        %v255 = vld [vmem:[%s239 + $0x38] sm:$0xff]
        %v256 = vld [vmem:[%s239 + $0x40] sm:$0xff]
        %v257 = vld [vmem:[%s239 + $0x48] sm:$0xff]
        %v258 = vld [vmem:[%s239 + $0x50] sm:$0xff]
        %v259 = vld [vmem:[%s239 + $0x58] sm:$0xff]
        %v260 = vld [vmem:[%s239 + $0x60] sm:$0xff]
        %v261 = vld [vmem:[%s239 + $0x68] sm:$0xff]
        %v262 = vld [vmem:[%s239 + $0x70] sm:$0xff]
        %v263 = vld [vmem:[%s239 + $0x78] sm:$0xff]
        %v264 = vld [vmem:[%s239 + $0x80] sm:$0xff]
        %v265 = vld [vmem:[%s239 + $0x88] sm:$0xff]
        %v266 = vld [vmem:[%s239 + $0x90] sm:$0xff]
        %v267 = vld [vmem:[%s239 + $0x98] sm:$0xff]
        %v268 = vld [vmem:[%s239 + $0xa0] sm:$0xff]
        %v269 = vld [vmem:[%s239 + $0xa8] sm:$0xff]
        %v270 = vld [vmem:[%s239 + $0xb0] sm:$0xff]
        %v271 = vld [vmem:[%s239 + $0xb8] sm:$0xff]
        %v272 = vld [vmem:[%s239 + $0xc0] sm:$0xff]
        %v273 = vld [vmem:[%s239 + $0xc8] sm:$0xff]
        %v274 = vld [vmem:[%s239 + $0xd0] sm:$0xff]
        %v275 = vld [vmem:[%s239 + $0xd8] sm:$0xff]
        %v276 = vld [vmem:[%s239 + $0xe0] sm:$0xff]
        %v277 = vld [vmem:[%s239 + $0xe8] sm:$0xff]
        %v278 = vld [vmem:[%s239 + $0xf0] sm:$0xff]
        %v279 = vld [vmem:[%s239 + $0xf8] sm:$0xff]
        %v280 = vld [vmem:[%s2] sm:$0xff]
        %v281 = vld [vmem:[%s2 + $0x8] sm:$0xff]
        %v282 = vld [vmem:[%s2 + $0x10] sm:$0xff]
        %v283 = vld [vmem:[%s2 + $0x18] sm:$0xff]
        %v284 = vld [vmem:[%s2 + $0x20] sm:$0xff]
        %v285 = vld [vmem:[%s2 + $0x28] sm:$0xff]
        %v286 = vld [vmem:[%s2 + $0x30] sm:$0xff]
        %v287 = vld [vmem:[%s2 + $0x38] sm:$0xff]
        %v288 = vld [vmem:[%s2 + $0x40] sm:$0xff]
        %v289 = vld [vmem:[%s2 + $0x48] sm:$0xff]
        %v290 = vld [vmem:[%s2 + $0x50] sm:$0xff]
        %v291 = vld [vmem:[%s2 + $0x58] sm:$0xff]
        %v292 = vld [vmem:[%s2 + $0x60] sm:$0xff]
        %v293 = vld [vmem:[%s2 + $0x68] sm:$0xff]
        %v294 = vld [vmem:[%s2 + $0x70] sm:$0xff]
        %v295 = vld [vmem:[%s2 + $0x78] sm:$0xff]
        %vm296 = vcmask 523264
        %v298 = vsel %vm296, %v248, 0
        %v301 = vsel %vm296, %v249, 0
        %v304 = vsel %vm296, %v250, 0
        %v307 = vsel %vm296, %v251, 0
        %v310 = vsel %vm296, %v252, 0
        %v313 = vsel %vm296, %v253, 0
        %v316 = vsel %vm296, %v254, 0
        %v319 = vsel %vm296, %v255, 0
        %v322 = vsel %vm296, %v256, 0
        %v325 = vsel %vm296, %v257, 0
        %v328 = vsel %vm296, %v258, 0
        %v331 = vsel %vm296, %v259, 0
        %v334 = vsel %vm296, %v260, 0
        %v337 = vsel %vm296, %v261, 0
        %v340 = vsel %vm296, %v262, 0
        %v343 = vsel %vm296, %v263, 0
        %v346 = vsel %vm296, %v264, 0
        %v349 = vsel %vm296, %v265, 0
        %v352 = vsel %vm296, %v266, 0
        %v355 = vsel %vm296, %v267, 0
        %v358 = vsel %vm296, %v268, 0
        %v361 = vsel %vm296, %v269, 0
        %v364 = vsel %vm296, %v270, 0
        %v367 = vsel %vm296, %v271, 0
        %v370 = vsel %vm296, %v272, 0
        %v373 = vsel %vm296, %v273, 0
        %v376 = vsel %vm296, %v274, 0
        %v379 = vsel %vm296, %v275, 0
        %v382 = vsel %vm296, %v276, 0
        %v385 = vsel %vm296, %v277, 0
        %v388 = vsel %vm296, %v278, 0
        %v391 = vsel %vm296, %v279, 0
        %393 = vmatprep.subr.mxu0 %v281
        %394 = vmatpush1.msra.mxu0 %v280
        %395 = vmatprep.subr.mxu0 %v283
        %396 = vmatpush1.msra.mxu0 %v282
        %397 = vmatprep.subr.mxu0 %v285
        %398 = vmatpush1.msra.mxu0 %v284
        %399 = vmatprep.subr.mxu0 %v287
        %400 = vmatpush1.msra.mxu0 %v286
        %401 = vmatprep.subr.mxu0 %v289
        %402 = vmatpush1.msra.mxu0 %v288
        %403 = vmatprep.subr.mxu0 %v291
        %404 = vmatpush1.msra.mxu0 %v290
        %405 = vmatprep.subr.mxu0 %v293
        %406 = vmatpush1.msra.mxu0 %v292
        %407 = vmatprep.subr.mxu0 %v295
        %408 = vmatpush1.msra.mxu0 %v294
        %409 = vmatprep.subr.mxu0 0.0
        %410 = vmatpush1.msra.mxu0 0.0
        %411 = vmatprep.subr.mxu0 0.0
        %412 = vmatpush1.msra.mxu0 0.0
        %413 = vmatprep.subr.mxu0 0.0
        %414 = vmatpush1.msra.mxu0 0.0
        %415 = vmatprep.subr.mxu0 0.0
        %416 = vmatpush1.msra.mxu0 0.0
        %417 = vmatprep.subr.mxu0 0.0
        %418 = vmatpush1.msra.mxu0 0.0
        %419 = vmatprep.subr.mxu0 0.0
        %420 = vmatpush1.msra.mxu0 0.0
        %421 = vmatprep.subr.mxu0 0.0
        %422 = vmatpush1.msra.mxu0 0.0
        %423 = vmatprep.subr.mxu0 0.0
        %424 = vmatpush1.msra.mxu0 0.0
        %425 = vmatprep.subr.mxu0 0.0
        %426 = vmatpush1.msra.mxu0 0.0
        %427 = vmatprep.subr.mxu0 0.0
        %428 = vmatpush1.msra.mxu0 0.0
        %429 = vmatprep.subr.mxu0 0.0
        %430 = vmatpush1.msra.mxu0 0.0
        %431 = vmatprep.subr.mxu0 0.0
        %432 = vmatpush1.msra.mxu0 0.0
        %433 = vmatprep.subr.mxu0 0.0
        %434 = vmatpush1.msra.mxu0 0.0
        %435 = vmatprep.subr.mxu0 0.0
        %436 = vmatpush1.msra.mxu0 0.0
        %437 = vmatprep.subr.mxu0 0.0
        %438 = vmatpush1.msra.mxu0 0.0
        %439 = vmatprep.subr.mxu0 0.0
        %440 = vmatpush1.msra.mxu0 0.0
        %441 = vmatprep.subr.mxu0 0.0
        %442 = vmatpush1.msra.mxu0 0.0
        %443 = vmatprep.subr.mxu0 0.0
        %444 = vmatpush1.msra.mxu0 0.0
        %445 = vmatprep.subr.mxu0 0.0
        %446 = vmatpush1.msra.mxu0 0.0
        %447 = vmatprep.subr.mxu0 0.0
        %448 = vmatpush1.msra.mxu0 0.0
        %449 = vmatprep.subr.mxu0 0.0
        %450 = vmatpush1.msra.mxu0 0.0
        %451 = vmatprep.subr.mxu0 0.0
        %452 = vmatpush1.msra.mxu0 0.0
        %453 = vmatprep.subr.mxu0 0.0
        %454 = vmatpush1.msra.mxu0 0.0
        %455 = vmatprep.subr.mxu0 0.0
        %456 = vmatpush1.msra.mxu0 0.0
        %457 = vmatprep.mubr.f32.mxu0 0.0
        %458 = vmatmul.mubr.f32.gmra.mrb[0].mxu0 %v298
        %v459 = vpop.f32.mrb[0].mxu0
        %v460 = vadd.f32 0.0, %v459
        %v461 = vpop.f32.mrb[0].mxu0
        %v462 = vadd.f32 0.0, %v461
        %463 = vmatprep.mubr.f32.mxu0 0.0
        %464 = vmatmul.mubr.f32.gmra.mrb[0].mxu0 %v301
        %v465 = vpop.f32.mrb[0].mxu0
        %v466 = vadd.f32 0.0, %v465
        %v467 = vpop.f32.mrb[0].mxu0
        %v468 = vadd.f32 0.0, %v467
        %469 = vmatprep.mubr.f32.mxu0 0.0
        %470 = vmatmul.mubr.f32.gmra.mrb[0].mxu0 %v304
        %v471 = vpop.f32.mrb[0].mxu0
        %v472 = vadd.f32 0.0, %v471
        %v473 = vpop.f32.mrb[0].mxu0
        %v474 = vadd.f32 0.0, %v473
        %475 = vmatprep.mubr.f32.mxu0 0.0
        %476 = vmatmul.mubr.f32.gmra.mrb[0].mxu0 %v307
        %v477 = vpop.f32.mrb[0].mxu0
        %v478 = vadd.f32 0.0, %v477
        %v479 = vpop.f32.mrb[0].mxu0
        %v480 = vadd.f32 0.0, %v479
        %481 = vmatprep.mubr.f32.mxu0 0.0
        %482 = vmatmul.mubr.f32.gmra.mrb[0].mxu0 %v310
        %v483 = vpop.f32.mrb[0].mxu0
        %v484 = vadd.f32 0.0, %v483
        %v485 = vpop.f32.mrb[0].mxu0
        %v486 = vadd.f32 0.0, %v485
        %487 = vmatprep.mubr.f32.mxu0 0.0
        %488 = vmatmul.mubr.f32.gmra.mrb[0].mxu0 %v313
        %v489 = vpop.f32.mrb[0].mxu0
        %v490 = vadd.f32 0.0, %v489
        %v491 = vpop.f32.mrb[0].mxu0
        %v492 = vadd.f32 0.0, %v491
        %493 = vmatprep.mubr.f32.mxu0 0.0
        %494 = vmatmul.mubr.f32.gmra.mrb[0].mxu0 %v316
        %v495 = vpop.f32.mrb[0].mxu0
        %v496 = vadd.f32 0.0, %v495
        %v497 = vpop.f32.mrb[0].mxu0
        %v498 = vadd.f32 0.0, %v497
        %499 = vmatprep.mubr.f32.mxu0 0.0
        %500 = vmatmul.mubr.f32.gmra.mrb[0].mxu0 %v319
        %v501 = vpop.f32.mrb[0].mxu0
        %v502 = vadd.f32 0.0, %v501
        %v503 = vpop.f32.mrb[0].mxu0
        %v504 = vadd.f32 0.0, %v503
        %505 = vmatprep.mubr.f32.mxu0 0.0
        %506 = vmatmul.mubr.f32.gmra.mrb[0].mxu0 %v322
        %v507 = vpop.f32.mrb[0].mxu0
        %v508 = vadd.f32 0.0, %v507
        %v509 = vpop.f32.mrb[0].mxu0
        %v510 = vadd.f32 0.0, %v509
        %511 = vmatprep.mubr.f32.mxu0 0.0
        %512 = vmatmul.mubr.f32.gmra.mrb[0].mxu0 %v325
        %v513 = vpop.f32.mrb[0].mxu0
        %v514 = vadd.f32 0.0, %v513
        %v515 = vpop.f32.mrb[0].mxu0
        %v516 = vadd.f32 0.0, %v515
        %517 = vmatprep.mubr.f32.mxu0 0.0
        %518 = vmatmul.mubr.f32.gmra.mrb[0].mxu0 %v328
        %v519 = vpop.f32.mrb[0].mxu0
        %v520 = vadd.f32 0.0, %v519
        %v521 = vpop.f32.mrb[0].mxu0
        %v522 = vadd.f32 0.0, %v521
        %523 = vmatprep.mubr.f32.mxu0 0.0
        %524 = vmatmul.mubr.f32.gmra.mrb[0].mxu0 %v331
        %v525 = vpop.f32.mrb[0].mxu0
        %v526 = vadd.f32 0.0, %v525
        %v527 = vpop.f32.mrb[0].mxu0
        %v528 = vadd.f32 0.0, %v527
        %529 = vmatprep.mubr.f32.mxu0 0.0
        %530 = vmatmul.mubr.f32.gmra.mrb[0].mxu0 %v334
        %v531 = vpop.f32.mrb[0].mxu0
        %v532 = vadd.f32 0.0, %v531
        %v533 = vpop.f32.mrb[0].mxu0
        %v534 = vadd.f32 0.0, %v533
        %535 = vmatprep.mubr.f32.mxu0 0.0
        %536 = vmatmul.mubr.f32.gmra.mrb[0].mxu0 %v337
        %v537 = vpop.f32.mrb[0].mxu0
        %v538 = vadd.f32 0.0, %v537
        %v539 = vpop.f32.mrb[0].mxu0
        %v540 = vadd.f32 0.0, %v539
        %541 = vmatprep.mubr.f32.mxu0 0.0
        %542 = vmatmul.mubr.f32.gmra.mrb[0].mxu0 %v340
        %v543 = vpop.f32.mrb[0].mxu0
        %v544 = vadd.f32 0.0, %v543
        %v545 = vpop.f32.mrb[0].mxu0
        %v546 = vadd.f32 0.0, %v545
        %547 = vmatprep.mubr.f32.mxu0 0.0
        %548 = vmatmul.mubr.f32.gmra.mrb[0].mxu0 %v343
        %v549 = vpop.f32.mrb[0].mxu0
        %v550 = vadd.f32 0.0, %v549
        %v551 = vpop.f32.mrb[0].mxu0
        %v552 = vadd.f32 0.0, %v551
        %553 = vmatprep.mubr.f32.mxu0 0.0
        %554 = vmatmul.mubr.f32.gmra.mrb[0].mxu0 %v346
        %v555 = vpop.f32.mrb[0].mxu0
        %v556 = vadd.f32 0.0, %v555
        %v557 = vpop.f32.mrb[0].mxu0
        %v558 = vadd.f32 0.0, %v557
        %559 = vmatprep.mubr.f32.mxu0 0.0
        %560 = vmatmul.mubr.f32.gmra.mrb[0].mxu0 %v349
        %v561 = vpop.f32.mrb[0].mxu0
        %v562 = vadd.f32 0.0, %v561
        %v563 = vpop.f32.mrb[0].mxu0
        %v564 = vadd.f32 0.0, %v563
        %565 = vmatprep.mubr.f32.mxu0 0.0
        %566 = vmatmul.mubr.f32.gmra.mrb[0].mxu0 %v352
        %v567 = vpop.f32.mrb[0].mxu0
        %v568 = vadd.f32 0.0, %v567
        %v569 = vpop.f32.mrb[0].mxu0
        %v570 = vadd.f32 0.0, %v569
        %571 = vmatprep.mubr.f32.mxu0 0.0
        %572 = vmatmul.mubr.f32.gmra.mrb[0].mxu0 %v355
        %v573 = vpop.f32.mrb[0].mxu0
        %v574 = vadd.f32 0.0, %v573
        %v575 = vpop.f32.mrb[0].mxu0
        %v576 = vadd.f32 0.0, %v575
        %577 = vmatprep.mubr.f32.mxu0 0.0
        %578 = vmatmul.mubr.f32.gmra.mrb[0].mxu0 %v358
        %v579 = vpop.f32.mrb[0].mxu0
        %v580 = vadd.f32 0.0, %v579
        %v581 = vpop.f32.mrb[0].mxu0
        %v582 = vadd.f32 0.0, %v581
        %583 = vmatprep.mubr.f32.mxu0 0.0
        %584 = vmatmul.mubr.f32.gmra.mrb[0].mxu0 %v361
        %v585 = vpop.f32.mrb[0].mxu0
        %v586 = vadd.f32 0.0, %v585
        %v587 = vpop.f32.mrb[0].mxu0
        %v588 = vadd.f32 0.0, %v587
        %589 = vmatprep.mubr.f32.mxu0 0.0
        %590 = vmatmul.mubr.f32.gmra.mrb[0].mxu0 %v364
        %v591 = vpop.f32.mrb[0].mxu0
        %v592 = vadd.f32 0.0, %v591
        %v593 = vpop.f32.mrb[0].mxu0
        %v594 = vadd.f32 0.0, %v593
        %595 = vmatprep.mubr.f32.mxu0 0.0
        %596 = vmatmul.mubr.f32.gmra.mrb[0].mxu0 %v367
        %v597 = vpop.f32.mrb[0].mxu0
        %v598 = vadd.f32 0.0, %v597
        %v599 = vpop.f32.mrb[0].mxu0
        %v600 = vadd.f32 0.0, %v599
        %601 = vmatprep.mubr.f32.mxu0 0.0
        %602 = vmatmul.mubr.f32.gmra.mrb[0].mxu0 %v370
        %v603 = vpop.f32.mrb[0].mxu0
        %v604 = vadd.f32 0.0, %v603
        %v605 = vpop.f32.mrb[0].mxu0
        %v606 = vadd.f32 0.0, %v605
        %607 = vmatprep.mubr.f32.mxu0 0.0
        %608 = vmatmul.mubr.f32.gmra.mrb[0].mxu0 %v373
        %v609 = vpop.f32.mrb[0].mxu0
        %v610 = vadd.f32 0.0, %v609
        %v611 = vpop.f32.mrb[0].mxu0
        %v612 = vadd.f32 0.0, %v611
        %613 = vmatprep.mubr.f32.mxu0 0.0
        %614 = vmatmul.mubr.f32.gmra.mrb[0].mxu0 %v376
        %v615 = vpop.f32.mrb[0].mxu0
        %v616 = vadd.f32 0.0, %v615
        %v617 = vpop.f32.mrb[0].mxu0
        %v618 = vadd.f32 0.0, %v617
        %619 = vmatprep.mubr.f32.mxu0 0.0
        %620 = vmatmul.mubr.f32.gmra.mrb[0].mxu0 %v379
        %v621 = vpop.f32.mrb[0].mxu0
        %v622 = vadd.f32 0.0, %v621
        %v623 = vpop.f32.mrb[0].mxu0
        %v624 = vadd.f32 0.0, %v623
        %625 = vmatprep.mubr.f32.mxu0 0.0
        %626 = vmatmul.mubr.f32.gmra.mrb[0].mxu0 %v382
        %v627 = vpop.f32.mrb[0].mxu0
        %v628 = vadd.f32 0.0, %v627
        %v629 = vpop.f32.mrb[0].mxu0
        %v630 = vadd.f32 0.0, %v629
        %631 = vmatprep.mubr.f32.mxu0 0.0
        %632 = vmatmul.mubr.f32.gmra.mrb[0].mxu0 %v385
        %v633 = vpop.f32.mrb[0].mxu0
        %v634 = vadd.f32 0.0, %v633
        %v635 = vpop.f32.mrb[0].mxu0
        %v636 = vadd.f32 0.0, %v635
        %637 = vmatprep.mubr.f32.mxu0 0.0
        %638 = vmatmul.mubr.f32.gmra.mrb[0].mxu0 %v388
        %v639 = vpop.f32.mrb[0].mxu0
        %v640 = vadd.f32 0.0, %v639
        %v641 = vpop.f32.mrb[0].mxu0
        %v642 = vadd.f32 0.0, %v641
        %643 = vmatprep.mubr.f32.mxu0 0.0
        %644 = vmatmul.mubr.f32.gmra.mrb[0].mxu0 %v391
        %v645 = vpop.f32.mrb[0].mxu0
        %v646 = vadd.f32 0.0, %v645
        %v647 = vpop.f32.mrb[0].mxu0
        %v648 = vadd.f32 0.0, %v647
        %649 = vdwg.mxu0
        %v650 = vld [vmem:[%s245] sm:$0xff]
        %v651 = vld [vmem:[%s245 + $0x8] sm:$0xff]
        %v652 = vld [vmem:[%s245 + $0x10] sm:$0xff]
        %v653 = vld [vmem:[%s245 + $0x18] sm:$0xff]
        %v654 = vld [vmem:[%s245 + $0x20] sm:$0xff]
        %v655 = vld [vmem:[%s245 + $0x28] sm:$0xff]
        %v656 = vld [vmem:[%s245 + $0x30] sm:$0xff]
        %v657 = vld [vmem:[%s245 + $0x38] sm:$0xff]
        %v658 = vld [vmem:[%s245 + $0x40] sm:$0xff]
        %v659 = vld [vmem:[%s245 + $0x48] sm:$0xff]
        %v660 = vld [vmem:[%s245 + $0x50] sm:$0xff]
        %v661 = vld [vmem:[%s245 + $0x58] sm:$0xff]
        %v662 = vld [vmem:[%s245 + $0x60] sm:$0xff]
        %v663 = vld [vmem:[%s245 + $0x68] sm:$0xff]
        %v664 = vld [vmem:[%s245 + $0x70] sm:$0xff]
        %v665 = vld [vmem:[%s245 + $0x78] sm:$0xff]
        %v666 = vld [vmem:[%s245 + $0x80] sm:$0xff]
        %v667 = vld [vmem:[%s245 + $0x88] sm:$0xff]
        %v668 = vld [vmem:[%s245 + $0x90] sm:$0xff]
        %v669 = vld [vmem:[%s245 + $0x98] sm:$0xff]
        %v670 = vld [vmem:[%s245 + $0xa0] sm:$0xff]
        %v671 = vld [vmem:[%s245 + $0xa8] sm:$0xff]
        %v672 = vld [vmem:[%s245 + $0xb0] sm:$0xff]
        %v673 = vld [vmem:[%s245 + $0xb8] sm:$0xff]
        %v674 = vld [vmem:[%s245 + $0xc0] sm:$0xff]
        %v675 = vld [vmem:[%s245 + $0xc8] sm:$0xff]
        %v676 = vld [vmem:[%s245 + $0xd0] sm:$0xff]
        %v677 = vld [vmem:[%s245 + $0xd8] sm:$0xff]
        %v678 = vld [vmem:[%s245 + $0xe0] sm:$0xff]
        %v679 = vld [vmem:[%s245 + $0xe8] sm:$0xff]
        %v680 = vld [vmem:[%s245 + $0xf0] sm:$0xff]
        %v681 = vld [vmem:[%s245 + $0xf8] sm:$0xff]
        %v682 = vld [vmem:[%s3] sm:$0xff]
        %v683 = vld [vmem:[%s3 + $0x8] sm:$0xff]
        %v684 = vld [vmem:[%s3 + $0x10] sm:$0xff]
        %v685 = vld [vmem:[%s3 + $0x18] sm:$0xff]
        %v686 = vld [vmem:[%s3 + $0x20] sm:$0xff]
        %v687 = vld [vmem:[%s3 + $0x28] sm:$0xff]
        %v688 = vld [vmem:[%s3 + $0x30] sm:$0xff]
        %v689 = vld [vmem:[%s3 + $0x38] sm:$0xff]
        %vm690 = vcmask 261120
        %v692 = vsel %vm690, %v650, 0
        %v695 = vsel %vm690, %v651, 0
        %v698 = vsel %vm690, %v652, 0
        %v701 = vsel %vm690, %v653, 0
        %v704 = vsel %vm690, %v654, 0
        %v707 = vsel %vm690, %v655, 0
        %v710 = vsel %vm690, %v656, 0
        %v713 = vsel %vm690, %v657, 0
        %v716 = vsel %vm690, %v658, 0
        %v719 = vsel %vm690, %v659, 0
        %v722 = vsel %vm690, %v660, 0
        %v725 = vsel %vm690, %v661, 0
        %v728 = vsel %vm690, %v662, 0
        %v731 = vsel %vm690, %v663, 0
        %v734 = vsel %vm690, %v664, 0
        %v737 = vsel %vm690, %v665, 0
        %v740 = vsel %vm690, %v666, 0
        %v743 = vsel %vm690, %v667, 0
        %v746 = vsel %vm690, %v668, 0
        %v749 = vsel %vm690, %v669, 0
        %v752 = vsel %vm690, %v670, 0
        %v755 = vsel %vm690, %v671, 0
        %v758 = vsel %vm690, %v672, 0
        %v761 = vsel %vm690, %v673, 0
        %v764 = vsel %vm690, %v674, 0
        %v767 = vsel %vm690, %v675, 0
        %v770 = vsel %vm690, %v676, 0
        %v773 = vsel %vm690, %v677, 0
        %v776 = vsel %vm690, %v678, 0
        %v779 = vsel %vm690, %v679, 0
        %v782 = vsel %vm690, %v680, 0
        %v785 = vsel %vm690, %v681, 0
        %787 = vmatprep.subr.mxu0 %v683
        %788 = vmatpush1.msra.mxu0 %v682
        %789 = vmatprep.subr.mxu0 %v685
        %790 = vmatpush1.msra.mxu0 %v684
        %791 = vmatprep.subr.mxu0 %v687
        %792 = vmatpush1.msra.mxu0 %v686
        %793 = vmatprep.subr.mxu0 %v689
        %794 = vmatpush1.msra.mxu0 %v688
        %795 = vmatprep.subr.mxu0 0.0
        %796 = vmatpush1.msra.mxu0 0.0
        %797 = vmatprep.subr.mxu0 0.0
        %798 = vmatpush1.msra.mxu0 0.0
        %799 = vmatprep.subr.mxu0 0.0
        %800 = vmatpush1.msra.mxu0 0.0
        %801 = vmatprep.subr.mxu0 0.0
        %802 = vmatpush1.msra.mxu0 0.0
        %803 = vmatprep.subr.mxu0 0.0
        %804 = vmatpush1.msra.mxu0 0.0
        %805 = vmatprep.subr.mxu0 0.0
        %806 = vmatpush1.msra.mxu0 0.0
        %807 = vmatprep.subr.mxu0 0.0
        %808 = vmatpush1.msra.mxu0 0.0
        %809 = vmatprep.subr.mxu0 0.0
        %810 = vmatpush1.msra.mxu0 0.0
        %811 = vmatprep.subr.mxu0 0.0
        %812 = vmatpush1.msra.mxu0 0.0
        %813 = vmatprep.subr.mxu0 0.0
        %814 = vmatpush1.msra.mxu0 0.0
        %815 = vmatprep.subr.mxu0 0.0
        %816 = vmatpush1.msra.mxu0 0.0
        %817 = vmatprep.subr.mxu0 0.0
        %818 = vmatpush1.msra.mxu0 0.0
        %819 = vmatprep.subr.mxu0 0.0
        %820 = vmatpush1.msra.mxu0 0.0
        %821 = vmatprep.subr.mxu0 0.0
        %822 = vmatpush1.msra.mxu0 0.0
        %823 = vmatprep.subr.mxu0 0.0
        %824 = vmatpush1.msra.mxu0 0.0
        %825 = vmatprep.subr.mxu0 0.0
        %826 = vmatpush1.msra.mxu0 0.0
        %827 = vmatprep.subr.mxu0 0.0
        %828 = vmatpush1.msra.mxu0 0.0
        %829 = vmatprep.subr.mxu0 0.0
        %830 = vmatpush1.msra.mxu0 0.0
        %831 = vmatprep.subr.mxu0 0.0
        %832 = vmatpush1.msra.mxu0 0.0
        %833 = vmatprep.subr.mxu0 0.0
        %834 = vmatpush1.msra.mxu0 0.0
        %835 = vmatprep.subr.mxu0 0.0
        %836 = vmatpush1.msra.mxu0 0.0
        %837 = vmatprep.subr.mxu0 0.0
        %838 = vmatpush1.msra.mxu0 0.0
        %839 = vmatprep.subr.mxu0 0.0
        %840 = vmatpush1.msra.mxu0 0.0
        %841 = vmatprep.subr.mxu0 0.0
        %842 = vmatpush1.msra.mxu0 0.0
        %843 = vmatprep.subr.mxu0 0.0
        %844 = vmatpush1.msra.mxu0 0.0
        %845 = vmatprep.subr.mxu0 0.0
        %846 = vmatpush1.msra.mxu0 0.0
        %847 = vmatprep.subr.mxu0 0.0
        %848 = vmatpush1.msra.mxu0 0.0
        %849 = vmatprep.subr.mxu0 0.0
        %850 = vmatpush1.msra.mxu0 0.0
        %851 = vmatprep.mubr.f32.mxu0 0.0
        %852 = vmatmul.mubr.f32.gmra.mrb[0].mxu0 %v692
        %v853 = vpop.f32.mrb[0].mxu0
        %v854 = vadd.f32 0.0, %v853
        %v855 = vpop.f32.mrb[0].mxu0
        %v856 = vadd.f32 0.0, %v855
        %857 = vmatprep.mubr.f32.mxu0 0.0
        %858 = vmatmul.mubr.f32.gmra.mrb[0].mxu0 %v695
        %v859 = vpop.f32.mrb[0].mxu0
        %v860 = vadd.f32 0.0, %v859
        %v861 = vpop.f32.mrb[0].mxu0
        %v862 = vadd.f32 0.0, %v861
        %863 = vmatprep.mubr.f32.mxu0 0.0
        %864 = vmatmul.mubr.f32.gmra.mrb[0].mxu0 %v698
        %v865 = vpop.f32.mrb[0].mxu0
        %v866 = vadd.f32 0.0, %v865
        %v867 = vpop.f32.mrb[0].mxu0
        %v868 = vadd.f32 0.0, %v867
        %869 = vmatprep.mubr.f32.mxu0 0.0
        %870 = vmatmul.mubr.f32.gmra.mrb[0].mxu0 %v701
        %v871 = vpop.f32.mrb[0].mxu0
        %v872 = vadd.f32 0.0, %v871
        %v873 = vpop.f32.mrb[0].mxu0
        %v874 = vadd.f32 0.0, %v873
        %875 = vmatprep.mubr.f32.mxu0 0.0
        %876 = vmatmul.mubr.f32.gmra.mrb[0].mxu0 %v704
        %v877 = vpop.f32.mrb[0].mxu0
        %v878 = vadd.f32 0.0, %v877
        %v879 = vpop.f32.mrb[0].mxu0
        %v880 = vadd.f32 0.0, %v879
        %881 = vmatprep.mubr.f32.mxu0 0.0
        %882 = vmatmul.mubr.f32.gmra.mrb[0].mxu0 %v707
        %v883 = vpop.f32.mrb[0].mxu0
        %v884 = vadd.f32 0.0, %v883
        %v885 = vpop.f32.mrb[0].mxu0
        %v886 = vadd.f32 0.0, %v885
        %887 = vmatprep.mubr.f32.mxu0 0.0
        %888 = vmatmul.mubr.f32.gmra.mrb[0].mxu0 %v710
        %v889 = vpop.f32.mrb[0].mxu0
        %v890 = vadd.f32 0.0, %v889
        %v891 = vpop.f32.mrb[0].mxu0
        %v892 = vadd.f32 0.0, %v891
        %893 = vmatprep.mubr.f32.mxu0 0.0
        %894 = vmatmul.mubr.f32.gmra.mrb[0].mxu0 %v713
        %v895 = vpop.f32.mrb[0].mxu0
        %v896 = vadd.f32 0.0, %v895
        %v897 = vpop.f32.mrb[0].mxu0
        %v898 = vadd.f32 0.0, %v897
        %899 = vmatprep.mubr.f32.mxu0 0.0
        %900 = vmatmul.mubr.f32.gmra.mrb[0].mxu0 %v716
        %v901 = vpop.f32.mrb[0].mxu0
        %v902 = vadd.f32 0.0, %v901
        %v903 = vpop.f32.mrb[0].mxu0
        %v904 = vadd.f32 0.0, %v903
        %905 = vmatprep.mubr.f32.mxu0 0.0
        %906 = vmatmul.mubr.f32.gmra.mrb[0].mxu0 %v719
        %v907 = vpop.f32.mrb[0].mxu0
        %v908 = vadd.f32 0.0, %v907
        %v909 = vpop.f32.mrb[0].mxu0
        %v910 = vadd.f32 0.0, %v909
        %911 = vmatprep.mubr.f32.mxu0 0.0
        %912 = vmatmul.mubr.f32.gmra.mrb[0].mxu0 %v722
        %v913 = vpop.f32.mrb[0].mxu0
        %v914 = vadd.f32 0.0, %v913
        %v915 = vpop.f32.mrb[0].mxu0
        %v916 = vadd.f32 0.0, %v915
        %917 = vmatprep.mubr.f32.mxu0 0.0
        %918 = vmatmul.mubr.f32.gmra.mrb[0].mxu0 %v725
        %v919 = vpop.f32.mrb[0].mxu0
        %v920 = vadd.f32 0.0, %v919
        %v921 = vpop.f32.mrb[0].mxu0
        %v922 = vadd.f32 0.0, %v921
        %923 = vmatprep.mubr.f32.mxu0 0.0
        %924 = vmatmul.mubr.f32.gmra.mrb[0].mxu0 %v728
        %v925 = vpop.f32.mrb[0].mxu0
        %v926 = vadd.f32 0.0, %v925
        %v927 = vpop.f32.mrb[0].mxu0
        %v928 = vadd.f32 0.0, %v927
        %929 = vmatprep.mubr.f32.mxu0 0.0
        %930 = vmatmul.mubr.f32.gmra.mrb[0].mxu0 %v731
        %v931 = vpop.f32.mrb[0].mxu0
        %v932 = vadd.f32 0.0, %v931
        %v933 = vpop.f32.mrb[0].mxu0
        %v934 = vadd.f32 0.0, %v933
        %935 = vmatprep.mubr.f32.mxu0 0.0
        %936 = vmatmul.mubr.f32.gmra.mrb[0].mxu0 %v734
        %v937 = vpop.f32.mrb[0].mxu0
        %v938 = vadd.f32 0.0, %v937
        %v939 = vpop.f32.mrb[0].mxu0
        %v940 = vadd.f32 0.0, %v939
        %941 = vmatprep.mubr.f32.mxu0 0.0
        %942 = vmatmul.mubr.f32.gmra.mrb[0].mxu0 %v737
        %v943 = vpop.f32.mrb[0].mxu0
        %v944 = vadd.f32 0.0, %v943
        %v945 = vpop.f32.mrb[0].mxu0
        %v946 = vadd.f32 0.0, %v945
        %947 = vmatprep.mubr.f32.mxu0 0.0
        %948 = vmatmul.mubr.f32.gmra.mrb[0].mxu0 %v740
        %v949 = vpop.f32.mrb[0].mxu0
        %v950 = vadd.f32 0.0, %v949
        %v951 = vpop.f32.mrb[0].mxu0
        %v952 = vadd.f32 0.0, %v951
        %953 = vmatprep.mubr.f32.mxu0 0.0
        %954 = vmatmul.mubr.f32.gmra.mrb[0].mxu0 %v743
        %v955 = vpop.f32.mrb[0].mxu0
        %v956 = vadd.f32 0.0, %v955
        %v957 = vpop.f32.mrb[0].mxu0
        %v958 = vadd.f32 0.0, %v957
        %959 = vmatprep.mubr.f32.mxu0 0.0
        %960 = vmatmul.mubr.f32.gmra.mrb[0].mxu0 %v746
        %v961 = vpop.f32.mrb[0].mxu0
        %v962 = vadd.f32 0.0, %v961
        %v963 = vpop.f32.mrb[0].mxu0
        %v964 = vadd.f32 0.0, %v963
        %965 = vmatprep.mubr.f32.mxu0 0.0
        %966 = vmatmul.mubr.f32.gmra.mrb[0].mxu0 %v749
        %v967 = vpop.f32.mrb[0].mxu0
        %v968 = vadd.f32 0.0, %v967
        %v969 = vpop.f32.mrb[0].mxu0
        %v970 = vadd.f32 0.0, %v969
        %971 = vmatprep.mubr.f32.mxu0 0.0
        %972 = vmatmul.mubr.f32.gmra.mrb[0].mxu0 %v752
        %v973 = vpop.f32.mrb[0].mxu0
        %v974 = vadd.f32 0.0, %v973
        %v975 = vpop.f32.mrb[0].mxu0
        %v976 = vadd.f32 0.0, %v975
        %977 = vmatprep.mubr.f32.mxu0 0.0
        %978 = vmatmul.mubr.f32.gmra.mrb[0].mxu0 %v755
        %v979 = vpop.f32.mrb[0].mxu0
        %v980 = vadd.f32 0.0, %v979
        %v981 = vpop.f32.mrb[0].mxu0
        %v982 = vadd.f32 0.0, %v981
        %983 = vmatprep.mubr.f32.mxu0 0.0
        %984 = vmatmul.mubr.f32.gmra.mrb[0].mxu0 %v758
        %v985 = vpop.f32.mrb[0].mxu0
        %v986 = vadd.f32 0.0, %v985
        %v987 = vpop.f32.mrb[0].mxu0
        %v988 = vadd.f32 0.0, %v987
        %989 = vmatprep.mubr.f32.mxu0 0.0
        %990 = vmatmul.mubr.f32.gmra.mrb[0].mxu0 %v761
        %v991 = vpop.f32.mrb[0].mxu0
        %v992 = vadd.f32 0.0, %v991
        %v993 = vpop.f32.mrb[0].mxu0
        %v994 = vadd.f32 0.0, %v993
        %995 = vmatprep.mubr.f32.mxu0 0.0
        %996 = vmatmul.mubr.f32.gmra.mrb[0].mxu0 %v764
        %v997 = vpop.f32.mrb[0].mxu0
        %v998 = vadd.f32 0.0, %v997
        %v999 = vpop.f32.mrb[0].mxu0
        %v1000 = vadd.f32 0.0, %v999
        %1001 = vmatprep.mubr.f32.mxu0 0.0
        %1002 = vmatmul.mubr.f32.gmra.mrb[0].mxu0 %v767
        %v1003 = vpop.f32.mrb[0].mxu0
        %v1004 = vadd.f32 0.0, %v1003
        %v1005 = vpop.f32.mrb[0].mxu0
        %v1006 = vadd.f32 0.0, %v1005
        %1007 = vmatprep.mubr.f32.mxu0 0.0
        %1008 = vmatmul.mubr.f32.gmra.mrb[0].mxu0 %v770
        %v1009 = vpop.f32.mrb[0].mxu0
        %v1010 = vadd.f32 0.0, %v1009
        %v1011 = vpop.f32.mrb[0].mxu0
        %v1012 = vadd.f32 0.0, %v1011
        %1013 = vmatprep.mubr.f32.mxu0 0.0
        %1014 = vmatmul.mubr.f32.gmra.mrb[0].mxu0 %v773
        %v1015 = vpop.f32.mrb[0].mxu0
        %v1016 = vadd.f32 0.0, %v1015
        %v1017 = vpop.f32.mrb[0].mxu0
        %v1018 = vadd.f32 0.0, %v1017
        %1019 = vmatprep.mubr.f32.mxu0 0.0
        %1020 = vmatmul.mubr.f32.gmra.mrb[0].mxu0 %v776
        %v1021 = vpop.f32.mrb[0].mxu0
        %v1022 = vadd.f32 0.0, %v1021
        %v1023 = vpop.f32.mrb[0].mxu0
        %v1024 = vadd.f32 0.0, %v1023
        %1025 = vmatprep.mubr.f32.mxu0 0.0
        %1026 = vmatmul.mubr.f32.gmra.mrb[0].mxu0 %v779
        %v1027 = vpop.f32.mrb[0].mxu0
        %v1028 = vadd.f32 0.0, %v1027
        %v1029 = vpop.f32.mrb[0].mxu0
        %v1030 = vadd.f32 0.0, %v1029
        %1031 = vmatprep.mubr.f32.mxu0 0.0
        %1032 = vmatmul.mubr.f32.gmra.mrb[0].mxu0 %v782
        %v1033 = vpop.f32.mrb[0].mxu0
        %v1034 = vadd.f32 0.0, %v1033
        %v1035 = vpop.f32.mrb[0].mxu0
        %v1036 = vadd.f32 0.0, %v1035
        %1037 = vmatprep.mubr.f32.mxu0 0.0
        %1038 = vmatmul.mubr.f32.gmra.mrb[0].mxu0 %v785
        %v1039 = vpop.f32.mrb[0].mxu0
        %v1040 = vadd.f32 0.0, %v1039
        %v1041 = vpop.f32.mrb[0].mxu0
        %v1042 = vadd.f32 0.0, %v1041
        %1043 = vdwg.mxu0
        %v1044 = vmul.f32 %v460, %v854
        %v1045 = vmul.f32 %v462, %v856
        %v1046 = vmul.f32 %v466, %v860
        %v1047 = vmul.f32 %v468, %v862
        %v1048 = vmul.f32 %v472, %v866
        %v1049 = vmul.f32 %v474, %v868
        %v1050 = vmul.f32 %v478, %v872
        %v1051 = vmul.f32 %v480, %v874
        %v1052 = vmul.f32 %v484, %v878
        %v1053 = vmul.f32 %v486, %v880
        %v1054 = vmul.f32 %v490, %v884
        %v1055 = vmul.f32 %v492, %v886
        %v1056 = vmul.f32 %v496, %v890
        %v1057 = vmul.f32 %v498, %v892
        %v1058 = vmul.f32 %v502, %v896
        %v1059 = vmul.f32 %v504, %v898
        %v1060 = vmul.f32 %v508, %v902
        %v1061 = vmul.f32 %v510, %v904
        %v1062 = vmul.f32 %v514, %v908
        %v1063 = vmul.f32 %v516, %v910
        %v1064 = vmul.f32 %v520, %v914
        %v1065 = vmul.f32 %v522, %v916
        %v1066 = vmul.f32 %v526, %v920
        %v1067 = vmul.f32 %v528, %v922
        %v1068 = vmul.f32 %v532, %v926
        %v1069 = vmul.f32 %v534, %v928
        %v1070 = vmul.f32 %v538, %v932
        %v1071 = vmul.f32 %v540, %v934
        %v1072 = vmul.f32 %v544, %v938
        %v1073 = vmul.f32 %v546, %v940
        %v1074 = vmul.f32 %v550, %v944
        %v1075 = vmul.f32 %v552, %v946
        %v1076 = vmul.f32 %v556, %v950
        %v1077 = vmul.f32 %v558, %v952
        %v1078 = vmul.f32 %v562, %v956
        %v1079 = vmul.f32 %v564, %v958
        %v1080 = vmul.f32 %v568, %v962
        %v1081 = vmul.f32 %v570, %v964
        %v1082 = vmul.f32 %v574, %v968
        %v1083 = vmul.f32 %v576, %v970
        %v1084 = vmul.f32 %v580, %v974
        %v1085 = vmul.f32 %v582, %v976
        %v1086 = vmul.f32 %v586, %v980
        %v1087 = vmul.f32 %v588, %v982
        %v1088 = vmul.f32 %v592, %v986
        %v1089 = vmul.f32 %v594, %v988
        %v1090 = vmul.f32 %v598, %v992
        %v1091 = vmul.f32 %v600, %v994
        %v1092 = vmul.f32 %v604, %v998
        %v1093 = vmul.f32 %v606, %v1000
        %v1094 = vmul.f32 %v610, %v1004
        %v1095 = vmul.f32 %v612, %v1006
        %v1096 = vmul.f32 %v616, %v1010
        %v1097 = vmul.f32 %v618, %v1012
        %v1098 = vmul.f32 %v622, %v1016
        %v1099 = vmul.f32 %v624, %v1018
        %v1100 = vmul.f32 %v628, %v1022
        %v1101 = vmul.f32 %v630, %v1024
        %v1102 = vmul.f32 %v634, %v1028
        %v1103 = vmul.f32 %v636, %v1030
        %v1104 = vmul.f32 %v640, %v1034
        %v1105 = vmul.f32 %v642, %v1036
        %v1106 = vmul.f32 %v646, %v1040
        %v1107 = vmul.f32 %v648, %v1042
        %v1108 = vld [vmem:[%s4] sm:$0xff]
        %v1109 = vld [vmem:[%s4 + $0x8] sm:$0xff]
        %v1110 = vld [vmem:[%s4 + $0x10] sm:$0xff]
        %v1111 = vld [vmem:[%s4 + $0x18] sm:$0xff]
        %v1112 = vld [vmem:[%s4 + $0x20] sm:$0xff]
        %v1113 = vld [vmem:[%s4 + $0x28] sm:$0xff]
        %v1114 = vld [vmem:[%s4 + $0x30] sm:$0xff]
        %v1115 = vld [vmem:[%s4 + $0x38] sm:$0xff]
        %v1116 = vld [vmem:[%s4 + $0x40] sm:$0xff]
        %v1117 = vld [vmem:[%s4 + $0x48] sm:$0xff]
        %v1118 = vld [vmem:[%s4 + $0x50] sm:$0xff]
        %v1119 = vld [vmem:[%s4 + $0x58] sm:$0xff]
        %v1120 = vld [vmem:[%s4 + $0x60] sm:$0xff]
        %v1121 = vld [vmem:[%s4 + $0x68] sm:$0xff]
        %v1122 = vld [vmem:[%s4 + $0x70] sm:$0xff]
        %v1123 = vld [vmem:[%s4 + $0x78] sm:$0xff]
        %v1124 = vld [vmem:[%s4 + $0x80] sm:$0xff]
        %v1125 = vld [vmem:[%s4 + $0x88] sm:$0xff]
        %v1126 = vld [vmem:[%s4 + $0x90] sm:$0xff]
        %v1127 = vld [vmem:[%s4 + $0x98] sm:$0xff]
        %v1128 = vld [vmem:[%s4 + $0xa0] sm:$0xff]
        %v1129 = vld [vmem:[%s4 + $0xa8] sm:$0xff]
        %v1130 = vld [vmem:[%s4 + $0xb0] sm:$0xff]
        %v1131 = vld [vmem:[%s4 + $0xb8] sm:$0xff]
        %v1132 = vld [vmem:[%s4 + $0xc0] sm:$0xff]
        %v1133 = vld [vmem:[%s4 + $0xc8] sm:$0xff]
        %v1134 = vld [vmem:[%s4 + $0xd0] sm:$0xff]
        %v1135 = vld [vmem:[%s4 + $0xd8] sm:$0xff]
        %v1136 = vld [vmem:[%s4 + $0xe0] sm:$0xff]
        %v1137 = vld [vmem:[%s4 + $0xe8] sm:$0xff]
        %v1138 = vld [vmem:[%s4 + $0xf0] sm:$0xff]
        %v1139 = vld [vmem:[%s4 + $0xf8] sm:$0xff]
        %v1140 = vld [vmem:[%s4 + $0x100] sm:$0xff]
        %v1141 = vld [vmem:[%s4 + $0x108] sm:$0xff]
        %v1142 = vld [vmem:[%s4 + $0x110] sm:$0xff]
        %v1143 = vld [vmem:[%s4 + $0x118] sm:$0xff]
        %v1144 = vld [vmem:[%s4 + $0x120] sm:$0xff]
        %v1145 = vld [vmem:[%s4 + $0x128] sm:$0xff]
        %v1146 = vld [vmem:[%s4 + $0x130] sm:$0xff]
        %v1147 = vld [vmem:[%s4 + $0x138] sm:$0xff]
        %v1148 = vld [vmem:[%s4 + $0x140] sm:$0xff]
        %v1149 = vld [vmem:[%s4 + $0x148] sm:$0xff]
        %v1150 = vld [vmem:[%s4 + $0x150] sm:$0xff]
        %v1151 = vld [vmem:[%s4 + $0x158] sm:$0xff]
        %v1152 = vld [vmem:[%s4 + $0x160] sm:$0xff]
        %v1153 = vld [vmem:[%s4 + $0x168] sm:$0xff]
        %v1154 = vld [vmem:[%s4 + $0x170] sm:$0xff]
        %v1155 = vld [vmem:[%s4 + $0x178] sm:$0xff]
        %v1156 = vld [vmem:[%s4 + $0x180] sm:$0xff]
        %v1157 = vld [vmem:[%s4 + $0x188] sm:$0xff]
        %v1158 = vld [vmem:[%s4 + $0x190] sm:$0xff]
        %v1159 = vld [vmem:[%s4 + $0x198] sm:$0xff]
        %v1160 = vld [vmem:[%s4 + $0x1a0] sm:$0xff]
        %v1161 = vld [vmem:[%s4 + $0x1a8] sm:$0xff]
        %v1162 = vld [vmem:[%s4 + $0x1b0] sm:$0xff]
        %v1163 = vld [vmem:[%s4 + $0x1b8] sm:$0xff]
        %v1164 = vld [vmem:[%s4 + $0x1c0] sm:$0xff]
        %v1165 = vld [vmem:[%s4 + $0x1c8] sm:$0xff]
        %v1166 = vld [vmem:[%s4 + $0x1d0] sm:$0xff]
        %v1167 = vld [vmem:[%s4 + $0x1d8] sm:$0xff]
        %v1168 = vld [vmem:[%s4 + $0x1e0] sm:$0xff]
        %v1169 = vld [vmem:[%s4 + $0x1e8] sm:$0xff]
        %v1170 = vld [vmem:[%s4 + $0x1f0] sm:$0xff]
        %v1171 = vld [vmem:[%s4 + $0x1f8] sm:$0xff]
        %1172 = vmatprep.subr.mxu0 %v1109
        %1173 = vmatpush1.msra.mxu0 %v1108
        %1174 = vmatprep.subr.mxu0 %v1111
        %1175 = vmatpush1.msra.mxu0 %v1110
        %1176 = vmatprep.subr.mxu0 %v1113
        %1177 = vmatpush1.msra.mxu0 %v1112
        %1178 = vmatprep.subr.mxu0 %v1115
        %1179 = vmatpush1.msra.mxu0 %v1114
        %1180 = vmatprep.subr.mxu0 %v1117
        %1181 = vmatpush1.msra.mxu0 %v1116
        %1182 = vmatprep.subr.mxu0 %v1119
        %1183 = vmatpush1.msra.mxu0 %v1118
        %1184 = vmatprep.subr.mxu0 %v1121
        %1185 = vmatpush1.msra.mxu0 %v1120
        %1186 = vmatprep.subr.mxu0 %v1123
        %1187 = vmatpush1.msra.mxu0 %v1122
        %1188 = vmatprep.subr.mxu0 %v1125
        %1189 = vmatpush1.msra.mxu0 %v1124
        %1190 = vmatprep.subr.mxu0 %v1127
        %1191 = vmatpush1.msra.mxu0 %v1126
        %1192 = vmatprep.subr.mxu0 %v1129
        %1193 = vmatpush1.msra.mxu0 %v1128
        %1194 = vmatprep.subr.mxu0 %v1131
        %1195 = vmatpush1.msra.mxu0 %v1130
        %1196 = vmatprep.subr.mxu0 %v1133
        %1197 = vmatpush1.msra.mxu0 %v1132
        %1198 = vmatprep.subr.mxu0 %v1135
        %1199 = vmatpush1.msra.mxu0 %v1134
        %1200 = vmatprep.subr.mxu0 %v1137
        %1201 = vmatpush1.msra.mxu0 %v1136
        %1202 = vmatprep.subr.mxu0 %v1139
        %1203 = vmatpush1.msra.mxu0 %v1138
        %1204 = vmatprep.subr.mxu0 %v1141
        %1205 = vmatpush1.msra.mxu0 %v1140
        %1206 = vmatprep.subr.mxu0 %v1143
        %1207 = vmatpush1.msra.mxu0 %v1142
        %1208 = vmatprep.subr.mxu0 %v1145
        %1209 = vmatpush1.msra.mxu0 %v1144
        %1210 = vmatprep.subr.mxu0 %v1147
        %1211 = vmatpush1.msra.mxu0 %v1146
        %1212 = vmatprep.subr.mxu0 %v1149
        %1213 = vmatpush1.msra.mxu0 %v1148
        %1214 = vmatprep.subr.mxu0 %v1151
        %1215 = vmatpush1.msra.mxu0 %v1150
        %1216 = vmatprep.subr.mxu0 %v1153
        %1217 = vmatpush1.msra.mxu0 %v1152
        %1218 = vmatprep.subr.mxu0 %v1155
        %1219 = vmatpush1.msra.mxu0 %v1154
        %1220 = vmatprep.subr.mxu0 %v1157
        %1221 = vmatpush1.msra.mxu0 %v1156
        %1222 = vmatprep.subr.mxu0 %v1159
        %1223 = vmatpush1.msra.mxu0 %v1158
        %1224 = vmatprep.subr.mxu0 %v1161
        %1225 = vmatpush1.msra.mxu0 %v1160
        %1226 = vmatprep.subr.mxu0 %v1163
        %1227 = vmatpush1.msra.mxu0 %v1162
        %1228 = vmatprep.subr.mxu0 %v1165
        %1229 = vmatpush1.msra.mxu0 %v1164
        %1230 = vmatprep.subr.mxu0 %v1167
        %1231 = vmatpush1.msra.mxu0 %v1166
        %1232 = vmatprep.subr.mxu0 %v1169
        %1233 = vmatpush1.msra.mxu0 %v1168
        %1234 = vmatprep.subr.mxu0 %v1171
        %1235 = vmatpush1.msra.mxu0 %v1170
        %1236 = vmatprep.mubr.f32.mxu0 %v1045
        %1237 = vmatmul.mubr.f32.gmra.mrb[0].mxu0 %v1044
        %v1238 = vpop.f32.mrb[0].mxu0
        %v1239 = vadd.f32 0.0, %v1238
        %v1240 = vpop.f32.mrb[0].mxu0
        %v1241 = vadd.f32 0.0, %v1240
        %1242 = vmatprep.mubr.f32.mxu0 %v1047
        %1243 = vmatmul.mubr.f32.gmra.mrb[0].mxu0 %v1046
        %v1244 = vpop.f32.mrb[0].mxu0
        %v1245 = vadd.f32 0.0, %v1244
        %v1246 = vpop.f32.mrb[0].mxu0
        %v1247 = vadd.f32 0.0, %v1246
        %1248 = vmatprep.mubr.f32.mxu0 %v1049
        %1249 = vmatmul.mubr.f32.gmra.mrb[0].mxu0 %v1048
        %v1250 = vpop.f32.mrb[0].mxu0
        %v1251 = vadd.f32 0.0, %v1250
        %v1252 = vpop.f32.mrb[0].mxu0
        %v1253 = vadd.f32 0.0, %v1252
        %1254 = vmatprep.mubr.f32.mxu0 %v1051
        %1255 = vmatmul.mubr.f32.gmra.mrb[0].mxu0 %v1050
        %v1256 = vpop.f32.mrb[0].mxu0
        %v1257 = vadd.f32 0.0, %v1256
        %v1258 = vpop.f32.mrb[0].mxu0
        %v1259 = vadd.f32 0.0, %v1258
        %1260 = vmatprep.mubr.f32.mxu0 %v1053
        %1261 = vmatmul.mubr.f32.gmra.mrb[0].mxu0 %v1052
        %v1262 = vpop.f32.mrb[0].mxu0
        %v1263 = vadd.f32 0.0, %v1262
        %v1264 = vpop.f32.mrb[0].mxu0
        %v1265 = vadd.f32 0.0, %v1264
        %1266 = vmatprep.mubr.f32.mxu0 %v1055
        %1267 = vmatmul.mubr.f32.gmra.mrb[0].mxu0 %v1054
        %v1268 = vpop.f32.mrb[0].mxu0
        %v1269 = vadd.f32 0.0, %v1268
        %v1270 = vpop.f32.mrb[0].mxu0
        %v1271 = vadd.f32 0.0, %v1270
        %1272 = vmatprep.mubr.f32.mxu0 %v1057
        %1273 = vmatmul.mubr.f32.gmra.mrb[0].mxu0 %v1056
        %v1274 = vpop.f32.mrb[0].mxu0
        %v1275 = vadd.f32 0.0, %v1274
        %v1276 = vpop.f32.mrb[0].mxu0
        %v1277 = vadd.f32 0.0, %v1276
        %1278 = vmatprep.mubr.f32.mxu0 %v1059
        %1279 = vmatmul.mubr.f32.gmra.mrb[0].mxu0 %v1058
        %v1280 = vpop.f32.mrb[0].mxu0
        %v1281 = vadd.f32 0.0, %v1280
        %v1282 = vpop.f32.mrb[0].mxu0
        %v1283 = vadd.f32 0.0, %v1282
        %1284 = vmatprep.mubr.f32.mxu0 %v1061
        %1285 = vmatmul.mubr.f32.gmra.mrb[0].mxu0 %v1060
        %v1286 = vpop.f32.mrb[0].mxu0
        %v1287 = vadd.f32 0.0, %v1286
        %v1288 = vpop.f32.mrb[0].mxu0
        %v1289 = vadd.f32 0.0, %v1288
        %1290 = vmatprep.mubr.f32.mxu0 %v1063
        %1291 = vmatmul.mubr.f32.gmra.mrb[0].mxu0 %v1062
        %v1292 = vpop.f32.mrb[0].mxu0
        %v1293 = vadd.f32 0.0, %v1292
        %v1294 = vpop.f32.mrb[0].mxu0
        %v1295 = vadd.f32 0.0, %v1294
        %1296 = vmatprep.mubr.f32.mxu0 %v1065
        %1297 = vmatmul.mubr.f32.gmra.mrb[0].mxu0 %v1064
        %v1298 = vpop.f32.mrb[0].mxu0
        %v1299 = vadd.f32 0.0, %v1298
        %v1300 = vpop.f32.mrb[0].mxu0
        %v1301 = vadd.f32 0.0, %v1300
        %1302 = vmatprep.mubr.f32.mxu0 %v1067
        %1303 = vmatmul.mubr.f32.gmra.mrb[0].mxu0 %v1066
        %v1304 = vpop.f32.mrb[0].mxu0
        %v1305 = vadd.f32 0.0, %v1304
        %v1306 = vpop.f32.mrb[0].mxu0
        %v1307 = vadd.f32 0.0, %v1306
        %1308 = vmatprep.mubr.f32.mxu0 %v1069
        %1309 = vmatmul.mubr.f32.gmra.mrb[0].mxu0 %v1068
        %v1310 = vpop.f32.mrb[0].mxu0
        %v1311 = vadd.f32 0.0, %v1310
        %v1312 = vpop.f32.mrb[0].mxu0
        %v1313 = vadd.f32 0.0, %v1312
        %1314 = vmatprep.mubr.f32.mxu0 %v1071
        %1315 = vmatmul.mubr.f32.gmra.mrb[0].mxu0 %v1070
        %v1316 = vpop.f32.mrb[0].mxu0
        %v1317 = vadd.f32 0.0, %v1316
        %v1318 = vpop.f32.mrb[0].mxu0
        %v1319 = vadd.f32 0.0, %v1318
        %1320 = vmatprep.mubr.f32.mxu0 %v1073
        %1321 = vmatmul.mubr.f32.gmra.mrb[0].mxu0 %v1072
        %v1322 = vpop.f32.mrb[0].mxu0
        %v1323 = vadd.f32 0.0, %v1322
        %v1324 = vpop.f32.mrb[0].mxu0
        %v1325 = vadd.f32 0.0, %v1324
        %1326 = vmatprep.mubr.f32.mxu0 %v1075
        %1327 = vmatmul.mubr.f32.gmra.mrb[0].mxu0 %v1074
        %v1328 = vpop.f32.mrb[0].mxu0
        %v1329 = vadd.f32 0.0, %v1328
        %v1330 = vpop.f32.mrb[0].mxu0
        %v1331 = vadd.f32 0.0, %v1330
        %1332 = vmatprep.mubr.f32.mxu0 %v1077
        %1333 = vmatmul.mubr.f32.gmra.mrb[0].mxu0 %v1076
        %v1334 = vpop.f32.mrb[0].mxu0
        %v1335 = vadd.f32 0.0, %v1334
        %v1336 = vpop.f32.mrb[0].mxu0
        %v1337 = vadd.f32 0.0, %v1336
        %1338 = vmatprep.mubr.f32.mxu0 %v1079
        %1339 = vmatmul.mubr.f32.gmra.mrb[0].mxu0 %v1078
        %v1340 = vpop.f32.mrb[0].mxu0
        %v1341 = vadd.f32 0.0, %v1340
        %v1342 = vpop.f32.mrb[0].mxu0
        %v1343 = vadd.f32 0.0, %v1342
        %1344 = vmatprep.mubr.f32.mxu0 %v1081
        %1345 = vmatmul.mubr.f32.gmra.mrb[0].mxu0 %v1080
        %v1346 = vpop.f32.mrb[0].mxu0
        %v1347 = vadd.f32 0.0, %v1346
        %v1348 = vpop.f32.mrb[0].mxu0
        %v1349 = vadd.f32 0.0, %v1348
        %1350 = vmatprep.mubr.f32.mxu0 %v1083
        %1351 = vmatmul.mubr.f32.gmra.mrb[0].mxu0 %v1082
        %v1352 = vpop.f32.mrb[0].mxu0
        %v1353 = vadd.f32 0.0, %v1352
        %v1354 = vpop.f32.mrb[0].mxu0
        %v1355 = vadd.f32 0.0, %v1354
        %1356 = vmatprep.mubr.f32.mxu0 %v1085
        %1357 = vmatmul.mubr.f32.gmra.mrb[0].mxu0 %v1084
        %v1358 = vpop.f32.mrb[0].mxu0
        %v1359 = vadd.f32 0.0, %v1358
        %v1360 = vpop.f32.mrb[0].mxu0
        %v1361 = vadd.f32 0.0, %v1360
        %1362 = vmatprep.mubr.f32.mxu0 %v1087
        %1363 = vmatmul.mubr.f32.gmra.mrb[0].mxu0 %v1086
        %v1364 = vpop.f32.mrb[0].mxu0
        %v1365 = vadd.f32 0.0, %v1364
        %v1366 = vpop.f32.mrb[0].mxu0
        %v1367 = vadd.f32 0.0, %v1366
        %1368 = vmatprep.mubr.f32.mxu0 %v1089
        %1369 = vmatmul.mubr.f32.gmra.mrb[0].mxu0 %v1088
        %v1370 = vpop.f32.mrb[0].mxu0
        %v1371 = vadd.f32 0.0, %v1370
        %v1372 = vpop.f32.mrb[0].mxu0
        %v1373 = vadd.f32 0.0, %v1372
        %1374 = vmatprep.mubr.f32.mxu0 %v1091
        %1375 = vmatmul.mubr.f32.gmra.mrb[0].mxu0 %v1090
        %v1376 = vpop.f32.mrb[0].mxu0
        %v1377 = vadd.f32 0.0, %v1376
        %v1378 = vpop.f32.mrb[0].mxu0
        %v1379 = vadd.f32 0.0, %v1378
        %1380 = vmatprep.mubr.f32.mxu0 %v1093
        %1381 = vmatmul.mubr.f32.gmra.mrb[0].mxu0 %v1092
        %v1382 = vpop.f32.mrb[0].mxu0
        %v1383 = vadd.f32 0.0, %v1382
        %v1384 = vpop.f32.mrb[0].mxu0
        %v1385 = vadd.f32 0.0, %v1384
        %1386 = vmatprep.mubr.f32.mxu0 %v1095
        %1387 = vmatmul.mubr.f32.gmra.mrb[0].mxu0 %v1094
        %v1388 = vpop.f32.mrb[0].mxu0
        %v1389 = vadd.f32 0.0, %v1388
        %v1390 = vpop.f32.mrb[0].mxu0
        %v1391 = vadd.f32 0.0, %v1390
        %1392 = vmatprep.mubr.f32.mxu0 %v1097
        %1393 = vmatmul.mubr.f32.gmra.mrb[0].mxu0 %v1096
        %v1394 = vpop.f32.mrb[0].mxu0
        %v1395 = vadd.f32 0.0, %v1394
        %v1396 = vpop.f32.mrb[0].mxu0
        %v1397 = vadd.f32 0.0, %v1396
        %1398 = vmatprep.mubr.f32.mxu0 %v1099
        %1399 = vmatmul.mubr.f32.gmra.mrb[0].mxu0 %v1098
        %v1400 = vpop.f32.mrb[0].mxu0
        %v1401 = vadd.f32 0.0, %v1400
        %v1402 = vpop.f32.mrb[0].mxu0
        %v1403 = vadd.f32 0.0, %v1402
        %1404 = vmatprep.mubr.f32.mxu0 %v1101
        %1405 = vmatmul.mubr.f32.gmra.mrb[0].mxu0 %v1100
        %v1406 = vpop.f32.mrb[0].mxu0
        %v1407 = vadd.f32 0.0, %v1406
        %v1408 = vpop.f32.mrb[0].mxu0
        %v1409 = vadd.f32 0.0, %v1408
        %1410 = vmatprep.mubr.f32.mxu0 %v1103
        %1411 = vmatmul.mubr.f32.gmra.mrb[0].mxu0 %v1102
        %v1412 = vpop.f32.mrb[0].mxu0
        %v1413 = vadd.f32 0.0, %v1412
        %v1414 = vpop.f32.mrb[0].mxu0
        %v1415 = vadd.f32 0.0, %v1414
        %1416 = vmatprep.mubr.f32.mxu0 %v1105
        %1417 = vmatmul.mubr.f32.gmra.mrb[0].mxu0 %v1104
        %v1418 = vpop.f32.mrb[0].mxu0
        %v1419 = vadd.f32 0.0, %v1418
        %v1420 = vpop.f32.mrb[0].mxu0
        %v1421 = vadd.f32 0.0, %v1420
        %1422 = vmatprep.mubr.f32.mxu0 %v1107
        %1423 = vmatmul.mubr.f32.gmra.mrb[0].mxu0 %v1106
        %v1424 = vpop.f32.mrb[0].mxu0
        %v1425 = vadd.f32 0.0, %v1424
        %v1426 = vpop.f32.mrb[0].mxu0
        %v1427 = vadd.f32 0.0, %v1426
        %1428 = vdwg.mxu0
        %1429 = vst [vmem:[%s234] sm:$0xff] %v1239
        %1430 = vst [vmem:[%s234 + $0x8] sm:$0xff] %v1241
        %1431 = vst [vmem:[%s234 + $0x10] sm:$0xff] %v1245
        %1432 = vst [vmem:[%s234 + $0x18] sm:$0xff] %v1247
        %1433 = vst [vmem:[%s234 + $0x20] sm:$0xff] %v1251
        %1434 = vst [vmem:[%s234 + $0x28] sm:$0xff] %v1253
        %1435 = vst [vmem:[%s234 + $0x30] sm:$0xff] %v1257
        %1436 = vst [vmem:[%s234 + $0x38] sm:$0xff] %v1259
        %1437 = vst [vmem:[%s234 + $0x40] sm:$0xff] %v1263
        %1438 = vst [vmem:[%s234 + $0x48] sm:$0xff] %v1265
        %1439 = vst [vmem:[%s234 + $0x50] sm:$0xff] %v1269
        %1440 = vst [vmem:[%s234 + $0x58] sm:$0xff] %v1271
        %1441 = vst [vmem:[%s234 + $0x60] sm:$0xff] %v1275
        %1442 = vst [vmem:[%s234 + $0x68] sm:$0xff] %v1277
        %1443 = vst [vmem:[%s234 + $0x70] sm:$0xff] %v1281
        %1444 = vst [vmem:[%s234 + $0x78] sm:$0xff] %v1283
        %1445 = vst [vmem:[%s234 + $0x80] sm:$0xff] %v1287
        %1446 = vst [vmem:[%s234 + $0x88] sm:$0xff] %v1289
        %1447 = vst [vmem:[%s234 + $0x90] sm:$0xff] %v1293
        %1448 = vst [vmem:[%s234 + $0x98] sm:$0xff] %v1295
        %1449 = vst [vmem:[%s234 + $0xa0] sm:$0xff] %v1299
        %1450 = vst [vmem:[%s234 + $0xa8] sm:$0xff] %v1301
        %1451 = vst [vmem:[%s234 + $0xb0] sm:$0xff] %v1305
        %1452 = vst [vmem:[%s234 + $0xb8] sm:$0xff] %v1307
        %1453 = vst [vmem:[%s234 + $0xc0] sm:$0xff] %v1311
        %1454 = vst [vmem:[%s234 + $0xc8] sm:$0xff] %v1313
        %1455 = vst [vmem:[%s234 + $0xd0] sm:$0xff] %v1317
        %1456 = vst [vmem:[%s234 + $0xd8] sm:$0xff] %v1319
        %1457 = vst [vmem:[%s234 + $0xe0] sm:$0xff] %v1323
        %1458 = vst [vmem:[%s234 + $0xe8] sm:$0xff] %v1325
        %1459 = vst [vmem:[%s234 + $0xf0] sm:$0xff] %v1329
        %1460 = vst [vmem:[%s234 + $0xf8] sm:$0xff] %v1331
        %1461 = vst [vmem:[%s234 + $0x100] sm:$0xff] %v1335
        %1462 = vst [vmem:[%s234 + $0x108] sm:$0xff] %v1337
        %1463 = vst [vmem:[%s234 + $0x110] sm:$0xff] %v1341
        %1464 = vst [vmem:[%s234 + $0x118] sm:$0xff] %v1343
        %1465 = vst [vmem:[%s234 + $0x120] sm:$0xff] %v1347
        %1466 = vst [vmem:[%s234 + $0x128] sm:$0xff] %v1349
        %1467 = vst [vmem:[%s234 + $0x130] sm:$0xff] %v1353
        %1468 = vst [vmem:[%s234 + $0x138] sm:$0xff] %v1355
        %1469 = vst [vmem:[%s234 + $0x140] sm:$0xff] %v1359
        %1470 = vst [vmem:[%s234 + $0x148] sm:$0xff] %v1361
        %1471 = vst [vmem:[%s234 + $0x150] sm:$0xff] %v1365
        %1472 = vst [vmem:[%s234 + $0x158] sm:$0xff] %v1367
        %1473 = vst [vmem:[%s234 + $0x160] sm:$0xff] %v1371
        %1474 = vst [vmem:[%s234 + $0x168] sm:$0xff] %v1373
        %1475 = vst [vmem:[%s234 + $0x170] sm:$0xff] %v1377
        %1476 = vst [vmem:[%s234 + $0x178] sm:$0xff] %v1379
        %1477 = vst [vmem:[%s234 + $0x180] sm:$0xff] %v1383
        %1478 = vst [vmem:[%s234 + $0x188] sm:$0xff] %v1385
        %1479 = vst [vmem:[%s234 + $0x190] sm:$0xff] %v1389
        %1480 = vst [vmem:[%s234 + $0x198] sm:$0xff] %v1391
        %1481 = vst [vmem:[%s234 + $0x1a0] sm:$0xff] %v1395
        %1482 = vst [vmem:[%s234 + $0x1a8] sm:$0xff] %v1397
        %1483 = vst [vmem:[%s234 + $0x1b0] sm:$0xff] %v1401
        %1484 = vst [vmem:[%s234 + $0x1b8] sm:$0xff] %v1403
        %1485 = vst [vmem:[%s234 + $0x1c0] sm:$0xff] %v1407
        %1486 = vst [vmem:[%s234 + $0x1c8] sm:$0xff] %v1409
        %1487 = vst [vmem:[%s234 + $0x1d0] sm:$0xff] %v1413
        %1488 = vst [vmem:[%s234 + $0x1d8] sm:$0xff] %v1415
        %1489 = vst [vmem:[%s234 + $0x1e0] sm:$0xff] %v1419
        %1490 = vst [vmem:[%s234 + $0x1e8] sm:$0xff] %v1421
        %1491 = vst [vmem:[%s234 + $0x1f0] sm:$0xff] %v1425
        %1492 = vst [vmem:[%s234 + $0x1f8] sm:$0xff] %v1427
        %s1493 = sand.u32 %s142, 1
        %s1494 = scalar_lea.sflag [#allocation3], %s1493
        %s1495 = sand.u32 %s142, 1
        %s1496 = smul.addr %s1495, 512
        %s1497 = scalar_lea.vmem [#allocation2], %s1496
        // Predicated region
        $region41: #{tpu_custom_call.1} parent=39 // pred_check
          %p1498 = pneg %p152
        $region42: #{tpu_custom_call.1} parent=39 // pred_check_branch
          %1500 = sbr.rel (%p1498) target = $region44
        $region43: #{tpu_custom_call.1} parent=39 // pred_region
          %s1501 = smul.u32 32, %s19
          %s1503 = ssub.s32 8192, 8192
          %1504 = vsyncadd %s1494, %s1503
          %s1505 = smul.addr %s1501, 2
          %s1506 = smul.addr %s1505, 128
          %s1507 = scalar_lea.hbm %s5, %s1506
          %s1508 = sshll.u32 %s1497, 4
          %s1509 = int_to_ptr.vmem [resolvable:$true] %s1508
          %1514 = dma.vmem_to_hbm [thread:$0]  %s1509, 8192, %s1507, %s1494, 256, 256, 16
        $region44: #{tpu_custom_call.1} parent=39 // pred_fallthru
          _
      $region40: #{tpu_custom_call.1} parent=5 // pred_fallthru
        _
      %p1515 = scmp.le.s32.totalorder 2, %s14
      // Predicated region
      $region45: #{tpu_custom_call.1} parent=5 // pred_check
        %p1516 = pneg %p1515
      $region46: #{tpu_custom_call.1} parent=5 // pred_check_branch
        %1518 = sbr.rel (%p1516) target = $region48
      $region47: #{tpu_custom_call.1} parent=5 // pred_region
        %s1519 = ssub.s32 %s14, 2
        // Predicated region
        $region49: #{tpu_custom_call.1} parent=47 // pred_check
          %p1520 = pneg %p158
        $region50: #{tpu_custom_call.1} parent=47 // pred_check_branch
          %1522 = sbr.rel (%p1520) target = $region52
        $region51: #{tpu_custom_call.1} parent=47 // pred_region
          %s1523 = sand.u32 %s143, 1
          %s1524 = scalar_lea.sflag [#allocation3], %s1523
          %s1525 = sand.u32 %s143, 1
          %s1526 = smul.addr %s1525, 512
          %s1527 = scalar_lea.vmem [#allocation2], %s1526
          %1528 = dma.done %s1524, 8192
        $region52: #{tpu_custom_call.1} parent=47 // pred_fallthru
          _
      $region48: #{tpu_custom_call.1} parent=5 // pred_fallthru
        _
    $region6: #{tpu_custom_call.1} parent=1 // loop_footer
      %s18 = sadd.s32 1, %s14
    $region7: #{tpu_custom_call.1} parent=1 // loop_footer_branch
      %13 = sbr.rel target = $region3
    $region8: #{tpu_custom_call.1} parent=1 // loop_exit
      _
    %1529 = vsyncpa [#allocation3], 1
    %s1530 = scalar_lea.sflag [#allocation3], 1
    %1531 = vsyncpa %s1530, 1

</llo_original>
